<compile_context>
chip_gen: v5e
topology: v5e:2x2
jax: 0.10.0
libtpu: 0.0.40
codegen_flags: <defaults>
</compile_context>

<pallas_src>
import jax
import jax.numpy as jnp
from jax.experimental import pallas as pl
from jax.experimental.pallas import tpu as pltpu


# ----------------------------------------------------------------------------
# Fused Pallas kernel: char LSTM -> last-step select -> word LSTM -> classifier
# ----------------------------------------------------------------------------
def _tagger_kernel(cpre_ref, cwhh_ref, sel_ref,
                   wpre_ref, wih_char_ref, wwhh_ref,
                   cls_w_ref, cls_b_ref,
                   logits_ref,
                   wpre_scr, h_all):
    """Shapes (gate order i|f|o|g, lane-concatenated):
      cpre_ref     : (L, W, 4*Hc)  char pre-gates (x @ W_ih + bias), per char step
      cwhh_ref     : (Hc, 4*Hc)    char recurrent weights (concatenated)
      sel_ref      : (L, W, 1)     1.0 at each word's last valid char step
      wpre_ref     : (T, 4*Hw)     word pre-gates from word embeddings (+ bias), B=1
      wih_char_ref : (Hc, 4*Hw)    char-feature part of the word input projection
      wwhh_ref     : (Hw, 4*Hw)    word recurrent weights (concatenated)
      cls_w_ref    : (Hw, n_tag),  cls_b_ref: (1, n_tag)
      logits_ref   : (T, n_tag)    output
      wpre_scr     : (T, 4*Hw)     VMEM scratch (full word pre-gates)
      h_all        : (T, Hw)       VMEM scratch (all word-LSTM hidden states)
    """
    L, W, Hc4 = cpre_ref.shape
    Hc = Hc4 // 4
    T, Hw4 = wpre_ref.shape
    Hw = Hw4 // 4

    def unroll_for(n):
        # Full unroll at toy trip counts, bounded partial unroll for larger T.
        return True if n <= 16 else 8

    def lstm_gates(z, H):
        # z: (B, 4H) lane-concatenated pre-activations, gate order i|f|o|g.
        sig = jax.nn.sigmoid(z[:, : 3 * H])   # one EUP issue covers i|f|o
        g = jnp.tanh(z[:, 3 * H:])            # one EUP issue for g
        return sig[:, :H], sig[:, H:2 * H], sig[:, 2 * H:3 * H], g

    # ---- char LSTM over L steps, batch = W words; select last valid h ----
    cwhh = cwhh_ref[...]                       # loaded once, resident across loop

    def c_step(t, carry):
        h, c, feat = carry                     # (W, Hc) each
        z = cpre_ref[t] + jnp.dot(h, cwhh, preferred_element_type=jnp.float32)
        i_g, f_g, o_g, g_g = lstm_gates(z, Hc)
        c_new = f_g * c + i_g * g_g
        h_new = o_g * jnp.tanh(c_new)
        feat = feat + sel_ref[t] * h_new       # accumulate h at each word's last step
        return h_new, c_new, feat

    zc = jnp.zeros((W, Hc), jnp.float32)
    _, _, char_feat = jax.lax.fori_loop(0, L, c_step, (zc, zc, zc),
                                        unroll=unroll_for(L))

    # ---- char features -> word input projection (one matmul), add emb part ----
    wpre_scr[...] = wpre_ref[...] + jnp.dot(char_feat, wih_char_ref[...],
                                            preferred_element_type=jnp.float32)

    # ---- word LSTM over T steps, batch = 1 ----
    wwhh = wwhh_ref[...]

    def w_step(t, carry):
        h, c = carry                           # (1, Hw) each
        z = wpre_scr[pl.ds(t, 1), :] + jnp.dot(h, wwhh,
                                               preferred_element_type=jnp.float32)
        i_g, f_g, o_g, g_g = lstm_gates(z, Hw)
        c_new = f_g * c + i_g * g_g
        h_new = o_g * jnp.tanh(c_new)
        h_all[pl.ds(t, 1), :] = h_new
        return h_new, c_new

    zw = jnp.zeros((1, Hw), jnp.float32)
    jax.lax.fori_loop(0, T, w_step, (zw, zw), unroll=unroll_for(T))

    # ---- fused classifier ----
    logits_ref[...] = (jnp.dot(h_all[...], cls_w_ref[...],
                               preferred_element_type=jnp.float32)
                       + cls_b_ref[...])


# ----------------------------------------------------------------------------
# Weight layout helpers (PyTorch nn.LSTM -> lane-concatenated i|f|o|g)
# ----------------------------------------------------------------------------
_GATE_PERM = (0, 1, 3, 2)   # PyTorch (i, f, g, o) -> (i, f, o, g)


def _reorder_cat_T(w, H):
    """w: (4H, X) PyTorch layout. Returns (X, 4H) with gate order i|f|o|g."""
    w4 = jnp.asarray(w, jnp.float32).reshape(4, H, -1)
    w4 = w4[jnp.asarray(_GATE_PERM)]
    return jnp.transpose(w4.reshape(4 * H, -1), (1, 0))


def _reorder_bias(b_ih, b_hh, H):
    b = (jnp.asarray(b_ih, jnp.float32) + jnp.asarray(b_hh, jnp.float32)).reshape(4, H)
    b = b[jnp.asarray(_GATE_PERM)]
    return b.reshape(1, 4 * H)


# ----------------------------------------------------------------------------
# Model forward (mirrors lstm_tagger.forward)
# ----------------------------------------------------------------------------
def make_sequence(tokens, dic):
    return jnp.asarray([dic[t.lower()] for t in tokens], dtype=jnp.int32)


def init_params(key, n_word, n_char, char_dim, word_dim,
                char_hidden, word_hidden, n_tag):
    ks = jax.random.split(key, 12)
    s = 0.1
    return {
        "word_embed": s * jax.random.normal(ks[0], (n_word, word_dim), jnp.float32),
        "char_embed": s * jax.random.normal(ks[1], (n_char, char_dim), jnp.float32),
        # char LSTM (PyTorch layout: w_ih (4H,D), w_hh (4H,H), b (4H,))
        "c_w_ih": s * jax.random.normal(ks[2], (4 * char_hidden, char_dim), jnp.float32),
        "c_w_hh": s * jax.random.normal(ks[3], (4 * char_hidden, char_hidden), jnp.float32),
        "c_b_ih": s * jax.random.normal(ks[4], (4 * char_hidden,), jnp.float32),
        "c_b_hh": s * jax.random.normal(ks[5], (4 * char_hidden,), jnp.float32),
        # word LSTM
        "w_w_ih": s * jax.random.normal(ks[6], (4 * word_hidden, word_dim + char_hidden), jnp.float32),
        "w_w_hh": s * jax.random.normal(ks[7], (4 * word_hidden, word_hidden), jnp.float32),
        "w_b_ih": s * jax.random.normal(ks[8], (4 * word_hidden,), jnp.float32),
        "w_b_hh": s * jax.random.normal(ks[9], (4 * word_hidden,), jnp.float32),
        # classifier
        "cls_w": s * jax.random.normal(ks[10], (n_tag, word_hidden), jnp.float32),
        "cls_b": s * jax.random.normal(ks[11], (n_tag,), jnp.float32),
    }


def lstm_tagger_forward(params, x_word_idx, words, char_to_idx):
    """x_word_idx: (1, T) int32 word indices; words: list[str] of the T words.
    Returns (T, n_tag) tag scores (== PyTorch (T*1, n_tag))."""
    T = len(words)
    lens = [len(w) for w in words]
    l_max = max(lens)

    char_hidden = params["c_w_hh"].shape[1]
    word_hidden = params["w_w_hh"].shape[1]
    word_dim = params["word_embed"].shape[1]
    n_tag = params["cls_w"].shape[0]

    # --- char indices padded to L_max; padded steps cannot affect the state
    #     read at step len-1 (LSTM state at t depends only on inputs <= t). ---
    padded = [[char_to_idx[ch] for ch in w.lower()] + [0] * (l_max - len(w))
              for w in words]
    char_idx = jnp.asarray(padded, dtype=jnp.int32)                     # (W=T, L)

    # TODO(synk): embedding gathers are data-dependent; they stay in plain JAX.
    cx = jnp.take(params["char_embed"], char_idx, axis=0)               # (W, L, char_dim)
    cx = jnp.transpose(cx, (1, 0, 2))                                   # (L, W, char_dim)

    # --- char LSTM prep: hoisted input projection + concatenated weights ---
    c_wih = _reorder_cat_T(params["c_w_ih"], char_hidden)               # (char_dim, 4Hc)
    c_whh = _reorder_cat_T(params["c_w_hh"], char_hidden)               # (Hc, 4Hc)
    c_b = _reorder_bias(params["c_b_ih"], params["c_b_hh"], char_hidden)  # (1, 4Hc)
    cpre = jnp.einsum("lwd,dk->lwk", cx.astype(jnp.float32), c_wih) + c_b  # (L, W, 4Hc)

    # one-hot selection mask for each word's last valid char step
    last_t = jnp.asarray([l - 1 for l in lens], dtype=jnp.int32)        # (W,)
    sel = jax.nn.one_hot(last_t, l_max, dtype=jnp.float32).T[:, :, None]  # (L, W, 1)

    # --- word LSTM prep: word-embedding part of pre-gates hoisted to XLA ---
    w_wih = _reorder_cat_T(params["w_w_ih"], word_hidden)               # (word_dim+Hc, 4Hw)
    w_wih_word = w_wih[:word_dim]                                       # (word_dim, 4Hw)
    w_wih_char = w_wih[word_dim:]                                       # (Hc, 4Hw)
    w_whh = _reorder_cat_T(params["w_w_hh"], word_hidden)               # (Hw, 4Hw)
    w_b = _reorder_bias(params["w_b_ih"], params["w_b_hh"], word_hidden)  # (1, 4Hw)

    x = jnp.take(params["word_embed"], x_word_idx[0], axis=0)           # (T, word_dim)
    wpre_emb = jnp.dot(x.astype(jnp.float32), w_wih_word) + w_b         # (T, 4Hw)

    cls_w_t = jnp.asarray(params["cls_w"], jnp.float32).T               # (Hw, n_tag)
    cls_b2 = jnp.asarray(params["cls_b"], jnp.float32).reshape(1, n_tag)

    Hc4, Hw4 = 4 * char_hidden, 4 * word_hidden
    logits = pl.pallas_call(
        _tagger_kernel,
        out_shape=jax.ShapeDtypeStruct((T, n_tag), jnp.float32),
        grid_spec=pltpu.PrefetchScalarGridSpec(
            num_scalar_prefetch=0,
            grid=(1,),
            in_specs=[
                pl.BlockSpec((l_max, T, Hc4), lambda i: (0, 0, 0)),   # cpre
                pl.BlockSpec((char_hidden, Hc4), lambda i: (0, 0)),   # c_whh
                pl.BlockSpec((l_max, T, 1), lambda i: (0, 0, 0)),     # sel
                pl.BlockSpec((T, Hw4), lambda i: (0, 0)),             # wpre_emb
                pl.BlockSpec((char_hidden, Hw4), lambda i: (0, 0)),   # w_ih char part
                pl.BlockSpec((word_hidden, Hw4), lambda i: (0, 0)),   # w_whh
                pl.BlockSpec((word_hidden, n_tag), lambda i: (0, 0)),  # cls_w
                pl.BlockSpec((1, n_tag), lambda i: (0, 0)),           # cls_b
            ],
            out_specs=pl.BlockSpec((T, n_tag), lambda i: (0, 0)),
            scratch_shapes=[
                pltpu.VMEM((T, Hw4), jnp.float32),       # full word pre-gates
                pltpu.VMEM((T, word_hidden), jnp.float32),  # all word hidden states
            ],
        ),
        compiler_params=pltpu.CompilerParams(
            dimension_semantics=("arbitrary",),
            vmem_limit_bytes=32 * 1024 * 1024,
        ),
    )(cpre, c_whh, sel, wpre_emb, w_wih_char, w_whh, cls_w_t, cls_b2)
    return logits


# ----------------------------------------------------------------------------
# Main
# ----------------------------------------------------------------------------
if __name__ == "__main__":
    test_sent = "Everybody ate the apple"
    words = test_sent.split()

    # build vocabularies deterministically
    word_to_idx = {}
    char_to_idx = {}
    for w in words:
        wl = w.lower()
        if wl not in word_to_idx:
            word_to_idx[wl] = len(word_to_idx)
        for ch in wl:
            if ch not in char_to_idx:
                char_to_idx[ch] = len(char_to_idx)

    n_word = len(word_to_idx)
    n_char = len(char_to_idx)

    # small, module-consistent sizes
    char_dim = 8
    word_dim = 16
    char_hidden = 16
    word_hidden = 32
    n_tag = 3

    key = jax.random.PRNGKey(0)
    params = init_params(key, n_word, n_char, char_dim, word_dim,
                         char_hidden, word_hidden, n_tag)

    # test input: (1, T) word indices, like test.unsqueeze(0) in the PyTorch code
    test = make_sequence(words, word_to_idx)[None, :]                 # (1, 4)

    out = lstm_tagger_forward(params, test, words, char_to_idx)       # (4, n_tag)
    out = jax.block_until_ready(out)

    assert out.shape == (len(words), n_tag), out.shape
    assert jnp.all(jnp.isfinite(out)), "non-finite output"
    print("KERNEL_OK")
</pallas_src>

<mosaic_0001>
module attributes {stable_mosaic.version = 11 : i64} {
  func.func @_tagger_kernel(%arg0: i32, %arg1: memref<9x4x64xf32, #tpu.memory_space<vmem>>, %arg2: memref<16x64xf32, #tpu.memory_space<vmem>>, %arg3: memref<9x4x1xf32, #tpu.memory_space<vmem>>, %arg4: memref<4x128xf32, #tpu.memory_space<vmem>>, %arg5: memref<16x128xf32, #tpu.memory_space<vmem>>, %arg6: memref<32x128xf32, #tpu.memory_space<vmem>>, %arg7: memref<32x3xf32, #tpu.memory_space<vmem>>, %arg8: memref<1x3xf32, #tpu.memory_space<vmem>>, %arg9: memref<4x3xf32, #tpu.memory_space<vmem>>, %arg10: memref<4x128xf32, #tpu.memory_space<vmem>>, %arg11: memref<4x32xf32, #tpu.memory_space<vmem>>) attributes {dimension_semantics = [#tpu.dimension_semantics<arbitrary>], iteration_bounds = array<i64: 1>, scalar_prefetch = 0 : i64, scratch_operands = 2 : i64, tpu.core_type = #tpu.core_type<tc>, window_params = [{pipeline_mode = #tpu.pipeline_mode<synchronous>, transform_indices = @transform_0, window_bounds = array<i64: 9, 4, 64>}, {pipeline_mode = #tpu.pipeline_mode<synchronous>, transform_indices = @transform_1, window_bounds = array<i64: 16, 64>}, {pipeline_mode = #tpu.pipeline_mode<synchronous>, transform_indices = @transform_2, window_bounds = array<i64: 9, 4, 1>}, {pipeline_mode = #tpu.pipeline_mode<synchronous>, transform_indices = @transform_3, window_bounds = array<i64: 4, 128>}, {pipeline_mode = #tpu.pipeline_mode<synchronous>, transform_indices = @transform_4, window_bounds = array<i64: 16, 128>}, {pipeline_mode = #tpu.pipeline_mode<synchronous>, transform_indices = @transform_5, window_bounds = array<i64: 32, 128>}, {pipeline_mode = #tpu.pipeline_mode<synchronous>, transform_indices = @transform_6, window_bounds = array<i64: 32, 3>}, {pipeline_mode = #tpu.pipeline_mode<synchronous>, transform_indices = @transform_7, window_bounds = array<i64: 1, 3>}, {pipeline_mode = #tpu.pipeline_mode<synchronous>, transform_indices = @transform_8, window_bounds = array<i64: 4, 3>}]} {
    %c0 = arith.constant 0 : index
    %c0_0 = arith.constant 0 : index
    %0 = vector.load %arg2[%c0, %c0_0] : memref<16x64xf32, #tpu.memory_space<vmem>>, vector<16x64xf32>
    %cst = arith.constant 0.000000e+00 : f32
    %1 = vector.broadcast %cst : f32 to vector<4x16xf32>
    %c0_i32 = arith.constant 0 : i32
    %2 = arith.index_cast %c0_i32 : i32 to index
    %c0_1 = arith.constant 0 : index
    %c0_2 = arith.constant 0 : index
    %3 = vector.load %arg1[%2, %c0_1, %c0_2] : memref<9x4x64xf32, #tpu.memory_space<vmem>>, vector<1x4x64xf32>
    %4 = vector.shape_cast %3 : vector<1x4x64xf32> to vector<4x64xf32>
    %cst_3 = arith.constant dense<0.000000e+00> : vector<4x64xf32>
    %5 = tpu.matmul %1, %0, %cst_3 {dimension_numbers = #tpu.dot_dimension_numbers<[1], [0], [0], [1], [0, 0, 1, 1], [], []>} : vector<4x16xf32>, vector<16x64xf32>, vector<4x64xf32> -> vector<4x64xf32>
    %6 = arith.addf %4, %5 : vector<4x64xf32>
    %7 = vector.extract_strided_slice %6 {offsets = [0, 0], sizes = [4, 48], strides = [1, 1]} : vector<4x64xf32> to vector<4x48xf32>
    %8 = arith.negf %7 : vector<4x48xf32>
    %9 = math.exp %8 : vector<4x48xf32>
    %cst_4 = arith.constant 1.000000e+00 : f32
    %10 = vector.broadcast %cst_4 : f32 to vector<4x48xf32>
    %11 = arith.addf %10, %9 : vector<4x48xf32>
    %12 = arith.divf %10, %11 : vector<4x48xf32>
    %13 = vector.extract_strided_slice %6 {offsets = [0, 48], sizes = [4, 16], strides = [1, 1]} : vector<4x64xf32> to vector<4x16xf32>
    %14 = math.tanh %13 : vector<4x16xf32>
    %15 = vector.extract_strided_slice %12 {offsets = [0, 0], sizes = [4, 16], strides = [1, 1]} : vector<4x48xf32> to vector<4x16xf32>
    %16 = vector.extract_strided_slice %12 {offsets = [0, 16], sizes = [4, 16], strides = [1, 1]} : vector<4x48xf32> to vector<4x16xf32>
    %17 = vector.extract_strided_slice %12 {offsets = [0, 32], sizes = [4, 16], strides = [1, 1]} : vector<4x48xf32> to vector<4x16xf32>
    %18 = arith.mulf %16, %1 : vector<4x16xf32>
    %19 = arith.mulf %15, %14 : vector<4x16xf32>
    %20 = arith.addf %18, %19 : vector<4x16xf32>
    %21 = math.tanh %20 : vector<4x16xf32>
    %22 = arith.mulf %17, %21 : vector<4x16xf32>
    %23 = arith.index_cast %c0_i32 : i32 to index
    %c0_5 = arith.constant 0 : index
    %c0_6 = arith.constant 0 : index
    %24 = vector.load %arg3[%23, %c0_5, %c0_6] : memref<9x4x1xf32, #tpu.memory_space<vmem>>, vector<1x4x1xf32>
    %25 = vector.shape_cast %24 : vector<1x4x1xf32> to vector<4x1xf32>
    %26 = vector.broadcast %25 : vector<4x1xf32> to vector<4x16xf32>
    %27 = arith.mulf %26, %22 : vector<4x16xf32>
    %28 = arith.addf %1, %27 : vector<4x16xf32>
    %c1_i32 = arith.constant 1 : i32
    %29 = arith.index_cast %c1_i32 : i32 to index
    %c0_7 = arith.constant 0 : index
    %c0_8 = arith.constant 0 : index
    %30 = vector.load %arg1[%29, %c0_7, %c0_8] : memref<9x4x64xf32, #tpu.memory_space<vmem>>, vector<1x4x64xf32>
    %31 = vector.shape_cast %30 : vector<1x4x64xf32> to vector<4x64xf32>
    %cst_9 = arith.constant dense<0.000000e+00> : vector<4x64xf32>
    %32 = tpu.matmul %22, %0, %cst_9 {dimension_numbers = #tpu.dot_dimension_numbers<[1], [0], [0], [1], [0, 0, 1, 1], [], []>} : vector<4x16xf32>, vector<16x64xf32>, vector<4x64xf32> -> vector<4x64xf32>
    %33 = arith.addf %31, %32 : vector<4x64xf32>
    %34 = vector.extract_strided_slice %33 {offsets = [0, 0], sizes = [4, 48], strides = [1, 1]} : vector<4x64xf32> to vector<4x48xf32>
    %35 = arith.negf %34 : vector<4x48xf32>
    %36 = math.exp %35 : vector<4x48xf32>
    %cst_10 = arith.constant 1.000000e+00 : f32
    %37 = vector.broadcast %cst_10 : f32 to vector<4x48xf32>
    %38 = arith.addf %37, %36 : vector<4x48xf32>
    %39 = arith.divf %37, %38 : vector<4x48xf32>
    %40 = vector.extract_strided_slice %33 {offsets = [0, 48], sizes = [4, 16], strides = [1, 1]} : vector<4x64xf32> to vector<4x16xf32>
    %41 = math.tanh %40 : vector<4x16xf32>
    %42 = vector.extract_strided_slice %39 {offsets = [0, 0], sizes = [4, 16], strides = [1, 1]} : vector<4x48xf32> to vector<4x16xf32>
    %43 = vector.extract_strided_slice %39 {offsets = [0, 16], sizes = [4, 16], strides = [1, 1]} : vector<4x48xf32> to vector<4x16xf32>
    %44 = vector.extract_strided_slice %39 {offsets = [0, 32], sizes = [4, 16], strides = [1, 1]} : vector<4x48xf32> to vector<4x16xf32>
    %45 = arith.mulf %43, %20 : vector<4x16xf32>
    %46 = arith.mulf %42, %41 : vector<4x16xf32>
    %47 = arith.addf %45, %46 : vector<4x16xf32>
    %48 = math.tanh %47 : vector<4x16xf32>
    %49 = arith.mulf %44, %48 : vector<4x16xf32>
    %50 = arith.index_cast %c1_i32 : i32 to index
    %c0_11 = arith.constant 0 : index
    %c0_12 = arith.constant 0 : index
    %51 = vector.load %arg3[%50, %c0_11, %c0_12] : memref<9x4x1xf32, #tpu.memory_space<vmem>>, vector<1x4x1xf32>
    %52 = vector.shape_cast %51 : vector<1x4x1xf32> to vector<4x1xf32>
    %53 = vector.broadcast %52 : vector<4x1xf32> to vector<4x16xf32>
    %54 = arith.mulf %53, %49 : vector<4x16xf32>
    %55 = arith.addf %28, %54 : vector<4x16xf32>
    %c2_i32 = arith.constant 2 : i32
    %56 = arith.index_cast %c2_i32 : i32 to index
    %c0_13 = arith.constant 0 : index
    %c0_14 = arith.constant 0 : index
    %57 = vector.load %arg1[%56, %c0_13, %c0_14] : memref<9x4x64xf32, #tpu.memory_space<vmem>>, vector<1x4x64xf32>
    %58 = vector.shape_cast %57 : vector<1x4x64xf32> to vector<4x64xf32>
    %cst_15 = arith.constant dense<0.000000e+00> : vector<4x64xf32>
    %59 = tpu.matmul %49, %0, %cst_15 {dimension_numbers = #tpu.dot_dimension_numbers<[1], [0], [0], [1], [0, 0, 1, 1], [], []>} : vector<4x16xf32>, vector<16x64xf32>, vector<4x64xf32> -> vector<4x64xf32>
    %60 = arith.addf %58, %59 : vector<4x64xf32>
    %61 = vector.extract_strided_slice %60 {offsets = [0, 0], sizes = [4, 48], strides = [1, 1]} : vector<4x64xf32> to vector<4x48xf32>
    %62 = arith.negf %61 : vector<4x48xf32>
    %63 = math.exp %62 : vector<4x48xf32>
    %cst_16 = arith.constant 1.000000e+00 : f32
    %64 = vector.broadcast %cst_16 : f32 to vector<4x48xf32>
    %65 = arith.addf %64, %63 : vector<4x48xf32>
    %66 = arith.divf %64, %65 : vector<4x48xf32>
    %67 = vector.extract_strided_slice %60 {offsets = [0, 48], sizes = [4, 16], strides = [1, 1]} : vector<4x64xf32> to vector<4x16xf32>
    %68 = math.tanh %67 : vector<4x16xf32>
    %69 = vector.extract_strided_slice %66 {offsets = [0, 0], sizes = [4, 16], strides = [1, 1]} : vector<4x48xf32> to vector<4x16xf32>
    %70 = vector.extract_strided_slice %66 {offsets = [0, 16], sizes = [4, 16], strides = [1, 1]} : vector<4x48xf32> to vector<4x16xf32>
    %71 = vector.extract_strided_slice %66 {offsets = [0, 32], sizes = [4, 16], strides = [1, 1]} : vector<4x48xf32> to vector<4x16xf32>
    %72 = arith.mulf %70, %47 : vector<4x16xf32>
    %73 = arith.mulf %69, %68 : vector<4x16xf32>
    %74 = arith.addf %72, %73 : vector<4x16xf32>
    %75 = math.tanh %74 : vector<4x16xf32>
    %76 = arith.mulf %71, %75 : vector<4x16xf32>
    %77 = arith.index_cast %c2_i32 : i32 to index
    %c0_17 = arith.constant 0 : index
    %c0_18 = arith.constant 0 : index
    %78 = vector.load %arg3[%77, %c0_17, %c0_18] : memref<9x4x1xf32, #tpu.memory_space<vmem>>, vector<1x4x1xf32>
    %79 = vector.shape_cast %78 : vector<1x4x1xf32> to vector<4x1xf32>
    %80 = vector.broadcast %79 : vector<4x1xf32> to vector<4x16xf32>
    %81 = arith.mulf %80, %76 : vector<4x16xf32>
    %82 = arith.addf %55, %81 : vector<4x16xf32>
    %c3_i32 = arith.constant 3 : i32
    %83 = arith.index_cast %c3_i32 : i32 to index
    %c0_19 = arith.constant 0 : index
    %c0_20 = arith.constant 0 : index
    %84 = vector.load %arg1[%83, %c0_19, %c0_20] : memref<9x4x64xf32, #tpu.memory_space<vmem>>, vector<1x4x64xf32>
    %85 = vector.shape_cast %84 : vector<1x4x64xf32> to vector<4x64xf32>
    %cst_21 = arith.constant dense<0.000000e+00> : vector<4x64xf32>
    %86 = tpu.matmul %76, %0, %cst_21 {dimension_numbers = #tpu.dot_dimension_numbers<[1], [0], [0], [1], [0, 0, 1, 1], [], []>} : vector<4x16xf32>, vector<16x64xf32>, vector<4x64xf32> -> vector<4x64xf32>
    %87 = arith.addf %85, %86 : vector<4x64xf32>
    %88 = vector.extract_strided_slice %87 {offsets = [0, 0], sizes = [4, 48], strides = [1, 1]} : vector<4x64xf32> to vector<4x48xf32>
    %89 = arith.negf %88 : vector<4x48xf32>
    %90 = math.exp %89 : vector<4x48xf32>
    %cst_22 = arith.constant 1.000000e+00 : f32
    %91 = vector.broadcast %cst_22 : f32 to vector<4x48xf32>
    %92 = arith.addf %91, %90 : vector<4x48xf32>
    %93 = arith.divf %91, %92 : vector<4x48xf32>
    %94 = vector.extract_strided_slice %87 {offsets = [0, 48], sizes = [4, 16], strides = [1, 1]} : vector<4x64xf32> to vector<4x16xf32>
    %95 = math.tanh %94 : vector<4x16xf32>
    %96 = vector.extract_strided_slice %93 {offsets = [0, 0], sizes = [4, 16], strides = [1, 1]} : vector<4x48xf32> to vector<4x16xf32>
    %97 = vector.extract_strided_slice %93 {offsets = [0, 16], sizes = [4, 16], strides = [1, 1]} : vector<4x48xf32> to vector<4x16xf32>
    %98 = vector.extract_strided_slice %93 {offsets = [0, 32], sizes = [4, 16], strides = [1, 1]} : vector<4x48xf32> to vector<4x16xf32>
    %99 = arith.mulf %97, %74 : vector<4x16xf32>
    %100 = arith.mulf %96, %95 : vector<4x16xf32>
    %101 = arith.addf %99, %100 : vector<4x16xf32>
    %102 = math.tanh %101 : vector<4x16xf32>
    %103 = arith.mulf %98, %102 : vector<4x16xf32>
    %104 = arith.index_cast %c3_i32 : i32 to index
    %c0_23 = arith.constant 0 : index
    %c0_24 = arith.constant 0 : index
    %105 = vector.load %arg3[%104, %c0_23, %c0_24] : memref<9x4x1xf32, #tpu.memory_space<vmem>>, vector<1x4x1xf32>
    %106 = vector.shape_cast %105 : vector<1x4x1xf32> to vector<4x1xf32>
    %107 = vector.broadcast %106 : vector<4x1xf32> to vector<4x16xf32>
    %108 = arith.mulf %107, %103 : vector<4x16xf32>
    %109 = arith.addf %82, %108 : vector<4x16xf32>
    %c4_i32 = arith.constant 4 : i32
    %110 = arith.index_cast %c4_i32 : i32 to index
    %c0_25 = arith.constant 0 : index
    %c0_26 = arith.constant 0 : index
    %111 = vector.load %arg1[%110, %c0_25, %c0_26] : memref<9x4x64xf32, #tpu.memory_space<vmem>>, vector<1x4x64xf32>
    %112 = vector.shape_cast %111 : vector<1x4x64xf32> to vector<4x64xf32>
    %cst_27 = arith.constant dense<0.000000e+00> : vector<4x64xf32>
    %113 = tpu.matmul %103, %0, %cst_27 {dimension_numbers = #tpu.dot_dimension_numbers<[1], [0], [0], [1], [0, 0, 1, 1], [], []>} : vector<4x16xf32>, vector<16x64xf32>, vector<4x64xf32> -> vector<4x64xf32>
    %114 = arith.addf %112, %113 : vector<4x64xf32>
    %115 = vector.extract_strided_slice %114 {offsets = [0, 0], sizes = [4, 48], strides = [1, 1]} : vector<4x64xf32> to vector<4x48xf32>
    %116 = arith.negf %115 : vector<4x48xf32>
    %117 = math.exp %116 : vector<4x48xf32>
    %cst_28 = arith.constant 1.000000e+00 : f32
    %118 = vector.broadcast %cst_28 : f32 to vector<4x48xf32>
    %119 = arith.addf %118, %117 : vector<4x48xf32>
    %120 = arith.divf %118, %119 : vector<4x48xf32>
    %121 = vector.extract_strided_slice %114 {offsets = [0, 48], sizes = [4, 16], strides = [1, 1]} : vector<4x64xf32> to vector<4x16xf32>
    %122 = math.tanh %121 : vector<4x16xf32>
    %123 = vector.extract_strided_slice %120 {offsets = [0, 0], sizes = [4, 16], strides = [1, 1]} : vector<4x48xf32> to vector<4x16xf32>
    %124 = vector.extract_strided_slice %120 {offsets = [0, 16], sizes = [4, 16], strides = [1, 1]} : vector<4x48xf32> to vector<4x16xf32>
    %125 = vector.extract_strided_slice %120 {offsets = [0, 32], sizes = [4, 16], strides = [1, 1]} : vector<4x48xf32> to vector<4x16xf32>
    %126 = arith.mulf %124, %101 : vector<4x16xf32>
    %127 = arith.mulf %123, %122 : vector<4x16xf32>
    %128 = arith.addf %126, %127 : vector<4x16xf32>
    %129 = math.tanh %128 : vector<4x16xf32>
    %130 = arith.mulf %125, %129 : vector<4x16xf32>
    %131 = arith.index_cast %c4_i32 : i32 to index
    %c0_29 = arith.constant 0 : index
    %c0_30 = arith.constant 0 : index
    %132 = vector.load %arg3[%131, %c0_29, %c0_30] : memref<9x4x1xf32, #tpu.memory_space<vmem>>, vector<1x4x1xf32>
    %133 = vector.shape_cast %132 : vector<1x4x1xf32> to vector<4x1xf32>
    %134 = vector.broadcast %133 : vector<4x1xf32> to vector<4x16xf32>
    %135 = arith.mulf %134, %130 : vector<4x16xf32>
    %136 = arith.addf %109, %135 : vector<4x16xf32>
    %c5_i32 = arith.constant 5 : i32
    %137 = arith.index_cast %c5_i32 : i32 to index
    %c0_31 = arith.constant 0 : index
    %c0_32 = arith.constant 0 : index
    %138 = vector.load %arg1[%137, %c0_31, %c0_32] : memref<9x4x64xf32, #tpu.memory_space<vmem>>, vector<1x4x64xf32>
    %139 = vector.shape_cast %138 : vector<1x4x64xf32> to vector<4x64xf32>
    %cst_33 = arith.constant dense<0.000000e+00> : vector<4x64xf32>
    %140 = tpu.matmul %130, %0, %cst_33 {dimension_numbers = #tpu.dot_dimension_numbers<[1], [0], [0], [1], [0, 0, 1, 1], [], []>} : vector<4x16xf32>, vector<16x64xf32>, vector<4x64xf32> -> vector<4x64xf32>
    %141 = arith.addf %139, %140 : vector<4x64xf32>
    %142 = vector.extract_strided_slice %141 {offsets = [0, 0], sizes = [4, 48], strides = [1, 1]} : vector<4x64xf32> to vector<4x48xf32>
    %143 = arith.negf %142 : vector<4x48xf32>
    %144 = math.exp %143 : vector<4x48xf32>
    %cst_34 = arith.constant 1.000000e+00 : f32
    %145 = vector.broadcast %cst_34 : f32 to vector<4x48xf32>
    %146 = arith.addf %145, %144 : vector<4x48xf32>
    %147 = arith.divf %145, %146 : vector<4x48xf32>
    %148 = vector.extract_strided_slice %141 {offsets = [0, 48], sizes = [4, 16], strides = [1, 1]} : vector<4x64xf32> to vector<4x16xf32>
    %149 = math.tanh %148 : vector<4x16xf32>
    %150 = vector.extract_strided_slice %147 {offsets = [0, 0], sizes = [4, 16], strides = [1, 1]} : vector<4x48xf32> to vector<4x16xf32>
    %151 = vector.extract_strided_slice %147 {offsets = [0, 16], sizes = [4, 16], strides = [1, 1]} : vector<4x48xf32> to vector<4x16xf32>
    %152 = vector.extract_strided_slice %147 {offsets = [0, 32], sizes = [4, 16], strides = [1, 1]} : vector<4x48xf32> to vector<4x16xf32>
    %153 = arith.mulf %151, %128 : vector<4x16xf32>
    %154 = arith.mulf %150, %149 : vector<4x16xf32>
    %155 = arith.addf %153, %154 : vector<4x16xf32>
    %156 = math.tanh %155 : vector<4x16xf32>
    %157 = arith.mulf %152, %156 : vector<4x16xf32>
    %158 = arith.index_cast %c5_i32 : i32 to index
    %c0_35 = arith.constant 0 : index
    %c0_36 = arith.constant 0 : index
    %159 = vector.load %arg3[%158, %c0_35, %c0_36] : memref<9x4x1xf32, #tpu.memory_space<vmem>>, vector<1x4x1xf32>
    %160 = vector.shape_cast %159 : vector<1x4x1xf32> to vector<4x1xf32>
    %161 = vector.broadcast %160 : vector<4x1xf32> to vector<4x16xf32>
    %162 = arith.mulf %161, %157 : vector<4x16xf32>
    %163 = arith.addf %136, %162 : vector<4x16xf32>
    %c6_i32 = arith.constant 6 : i32
    %164 = arith.index_cast %c6_i32 : i32 to index
    %c0_37 = arith.constant 0 : index
    %c0_38 = arith.constant 0 : index
    %165 = vector.load %arg1[%164, %c0_37, %c0_38] : memref<9x4x64xf32, #tpu.memory_space<vmem>>, vector<1x4x64xf32>
    %166 = vector.shape_cast %165 : vector<1x4x64xf32> to vector<4x64xf32>
    %cst_39 = arith.constant dense<0.000000e+00> : vector<4x64xf32>
    %167 = tpu.matmul %157, %0, %cst_39 {dimension_numbers = #tpu.dot_dimension_numbers<[1], [0], [0], [1], [0, 0, 1, 1], [], []>} : vector<4x16xf32>, vector<16x64xf32>, vector<4x64xf32> -> vector<4x64xf32>
    %168 = arith.addf %166, %167 : vector<4x64xf32>
    %169 = vector.extract_strided_slice %168 {offsets = [0, 0], sizes = [4, 48], strides = [1, 1]} : vector<4x64xf32> to vector<4x48xf32>
    %170 = arith.negf %169 : vector<4x48xf32>
    %171 = math.exp %170 : vector<4x48xf32>
    %cst_40 = arith.constant 1.000000e+00 : f32
    %172 = vector.broadcast %cst_40 : f32 to vector<4x48xf32>
    %173 = arith.addf %172, %171 : vector<4x48xf32>
    %174 = arith.divf %172, %173 : vector<4x48xf32>
    %175 = vector.extract_strided_slice %168 {offsets = [0, 48], sizes = [4, 16], strides = [1, 1]} : vector<4x64xf32> to vector<4x16xf32>
    %176 = math.tanh %175 : vector<4x16xf32>
    %177 = vector.extract_strided_slice %174 {offsets = [0, 0], sizes = [4, 16], strides = [1, 1]} : vector<4x48xf32> to vector<4x16xf32>
    %178 = vector.extract_strided_slice %174 {offsets = [0, 16], sizes = [4, 16], strides = [1, 1]} : vector<4x48xf32> to vector<4x16xf32>
    %179 = vector.extract_strided_slice %174 {offsets = [0, 32], sizes = [4, 16], strides = [1, 1]} : vector<4x48xf32> to vector<4x16xf32>
    %180 = arith.mulf %178, %155 : vector<4x16xf32>
    %181 = arith.mulf %177, %176 : vector<4x16xf32>
    %182 = arith.addf %180, %181 : vector<4x16xf32>
    %183 = math.tanh %182 : vector<4x16xf32>
    %184 = arith.mulf %179, %183 : vector<4x16xf32>
    %185 = arith.index_cast %c6_i32 : i32 to index
    %c0_41 = arith.constant 0 : index
    %c0_42 = arith.constant 0 : index
    %186 = vector.load %arg3[%185, %c0_41, %c0_42] : memref<9x4x1xf32, #tpu.memory_space<vmem>>, vector<1x4x1xf32>
    %187 = vector.shape_cast %186 : vector<1x4x1xf32> to vector<4x1xf32>
    %188 = vector.broadcast %187 : vector<4x1xf32> to vector<4x16xf32>
    %189 = arith.mulf %188, %184 : vector<4x16xf32>
    %190 = arith.addf %163, %189 : vector<4x16xf32>
    %c7_i32 = arith.constant 7 : i32
    %191 = arith.index_cast %c7_i32 : i32 to index
    %c0_43 = arith.constant 0 : index
    %c0_44 = arith.constant 0 : index
    %192 = vector.load %arg1[%191, %c0_43, %c0_44] : memref<9x4x64xf32, #tpu.memory_space<vmem>>, vector<1x4x64xf32>
    %193 = vector.shape_cast %192 : vector<1x4x64xf32> to vector<4x64xf32>
    %cst_45 = arith.constant dense<0.000000e+00> : vector<4x64xf32>
    %194 = tpu.matmul %184, %0, %cst_45 {dimension_numbers = #tpu.dot_dimension_numbers<[1], [0], [0], [1], [0, 0, 1, 1], [], []>} : vector<4x16xf32>, vector<16x64xf32>, vector<4x64xf32> -> vector<4x64xf32>
    %195 = arith.addf %193, %194 : vector<4x64xf32>
    %196 = vector.extract_strided_slice %195 {offsets = [0, 0], sizes = [4, 48], strides = [1, 1]} : vector<4x64xf32> to vector<4x48xf32>
    %197 = arith.negf %196 : vector<4x48xf32>
    %198 = math.exp %197 : vector<4x48xf32>
    %cst_46 = arith.constant 1.000000e+00 : f32
    %199 = vector.broadcast %cst_46 : f32 to vector<4x48xf32>
    %200 = arith.addf %199, %198 : vector<4x48xf32>
    %201 = arith.divf %199, %200 : vector<4x48xf32>
    %202 = vector.extract_strided_slice %195 {offsets = [0, 48], sizes = [4, 16], strides = [1, 1]} : vector<4x64xf32> to vector<4x16xf32>
    %203 = math.tanh %202 : vector<4x16xf32>
    %204 = vector.extract_strided_slice %201 {offsets = [0, 0], sizes = [4, 16], strides = [1, 1]} : vector<4x48xf32> to vector<4x16xf32>
    %205 = vector.extract_strided_slice %201 {offsets = [0, 16], sizes = [4, 16], strides = [1, 1]} : vector<4x48xf32> to vector<4x16xf32>
    %206 = vector.extract_strided_slice %201 {offsets = [0, 32], sizes = [4, 16], strides = [1, 1]} : vector<4x48xf32> to vector<4x16xf32>
    %207 = arith.mulf %205, %182 : vector<4x16xf32>
    %208 = arith.mulf %204, %203 : vector<4x16xf32>
    %209 = arith.addf %207, %208 : vector<4x16xf32>
    %210 = math.tanh %209 : vector<4x16xf32>
    %211 = arith.mulf %206, %210 : vector<4x16xf32>
    %212 = arith.index_cast %c7_i32 : i32 to index
    %c0_47 = arith.constant 0 : index
    %c0_48 = arith.constant 0 : index
    %213 = vector.load %arg3[%212, %c0_47, %c0_48] : memref<9x4x1xf32, #tpu.memory_space<vmem>>, vector<1x4x1xf32>
    %214 = vector.shape_cast %213 : vector<1x4x1xf32> to vector<4x1xf32>
    %215 = vector.broadcast %214 : vector<4x1xf32> to vector<4x16xf32>
    %216 = arith.mulf %215, %211 : vector<4x16xf32>
    %217 = arith.addf %190, %216 : vector<4x16xf32>
    %c8_i32 = arith.constant 8 : i32
    %218 = arith.index_cast %c8_i32 : i32 to index
    %c0_49 = arith.constant 0 : index
    %c0_50 = arith.constant 0 : index
    %219 = vector.load %arg1[%218, %c0_49, %c0_50] : memref<9x4x64xf32, #tpu.memory_space<vmem>>, vector<1x4x64xf32>
    %220 = vector.shape_cast %219 : vector<1x4x64xf32> to vector<4x64xf32>
    %cst_51 = arith.constant dense<0.000000e+00> : vector<4x64xf32>
    %221 = tpu.matmul %211, %0, %cst_51 {dimension_numbers = #tpu.dot_dimension_numbers<[1], [0], [0], [1], [0, 0, 1, 1], [], []>} : vector<4x16xf32>, vector<16x64xf32>, vector<4x64xf32> -> vector<4x64xf32>
    %222 = arith.addf %220, %221 : vector<4x64xf32>
    %223 = vector.extract_strided_slice %222 {offsets = [0, 0], sizes = [4, 48], strides = [1, 1]} : vector<4x64xf32> to vector<4x48xf32>
    %224 = arith.negf %223 : vector<4x48xf32>
    %225 = math.exp %224 : vector<4x48xf32>
    %cst_52 = arith.constant 1.000000e+00 : f32
    %226 = vector.broadcast %cst_52 : f32 to vector<4x48xf32>
    %227 = arith.addf %226, %225 : vector<4x48xf32>
    %228 = arith.divf %226, %227 : vector<4x48xf32>
    %229 = vector.extract_strided_slice %222 {offsets = [0, 48], sizes = [4, 16], strides = [1, 1]} : vector<4x64xf32> to vector<4x16xf32>
    %230 = math.tanh %229 : vector<4x16xf32>
    %231 = vector.extract_strided_slice %228 {offsets = [0, 0], sizes = [4, 16], strides = [1, 1]} : vector<4x48xf32> to vector<4x16xf32>
    %232 = vector.extract_strided_slice %228 {offsets = [0, 16], sizes = [4, 16], strides = [1, 1]} : vector<4x48xf32> to vector<4x16xf32>
    %233 = vector.extract_strided_slice %228 {offsets = [0, 32], sizes = [4, 16], strides = [1, 1]} : vector<4x48xf32> to vector<4x16xf32>
    %234 = arith.mulf %232, %209 : vector<4x16xf32>
    %235 = arith.mulf %231, %230 : vector<4x16xf32>
    %236 = arith.addf %234, %235 : vector<4x16xf32>
    %237 = math.tanh %236 : vector<4x16xf32>
    %238 = arith.mulf %233, %237 : vector<4x16xf32>
    %239 = arith.index_cast %c8_i32 : i32 to index
    %c0_53 = arith.constant 0 : index
    %c0_54 = arith.constant 0 : index
    %240 = vector.load %arg3[%239, %c0_53, %c0_54] : memref<9x4x1xf32, #tpu.memory_space<vmem>>, vector<1x4x1xf32>
    %241 = vector.shape_cast %240 : vector<1x4x1xf32> to vector<4x1xf32>
    %242 = vector.broadcast %241 : vector<4x1xf32> to vector<4x16xf32>
    %243 = arith.mulf %242, %238 : vector<4x16xf32>
    %244 = arith.addf %217, %243 : vector<4x16xf32>
    %c9_i32 = arith.constant 9 : i32
    %c0_55 = arith.constant 0 : index
    %c0_56 = arith.constant 0 : index
    %245 = vector.load %arg4[%c0_55, %c0_56] : memref<4x128xf32, #tpu.memory_space<vmem>>, vector<4x128xf32>
    %c0_57 = arith.constant 0 : index
    %c0_58 = arith.constant 0 : index
    %246 = vector.load %arg5[%c0_57, %c0_58] : memref<16x128xf32, #tpu.memory_space<vmem>>, vector<16x128xf32>
    %cst_59 = arith.constant dense<0.000000e+00> : vector<4x128xf32>
    %247 = tpu.matmul %244, %246, %cst_59 {dimension_numbers = #tpu.dot_dimension_numbers<[1], [0], [0], [1], [0, 0, 1, 1], [], []>} : vector<4x16xf32>, vector<16x128xf32>, vector<4x128xf32> -> vector<4x128xf32>
    %248 = arith.addf %245, %247 : vector<4x128xf32>
    %c0_60 = arith.constant 0 : index
    %c0_61 = arith.constant 0 : index
    %249 = vector.load %arg10[%c0_60, %c0_61] : memref<4x128xf32, #tpu.memory_space<vmem>>, vector<4x128xf32>
    tpu.vector_store %arg10[%c0_60, %c0_61], %248 {strides = array<i32>} : memref<4x128xf32, #tpu.memory_space<vmem>>, vector<4x128xf32>,
    %c0_62 = arith.constant 0 : index
    %c0_63 = arith.constant 0 : index
    %250 = vector.load %arg6[%c0_62, %c0_63] : memref<32x128xf32, #tpu.memory_space<vmem>>, vector<32x128xf32>
    %cst_64 = arith.constant 0.000000e+00 : f32
    %251 = vector.broadcast %cst_64 : f32 to vector<1x32xf32>
    %c0_i32_65 = arith.constant 0 : i32
    %252 = arith.index_cast %c0_i32_65 : i32 to index
    %c0_66 = arith.constant 0 : index
    %253 = vector.load %arg10[%252, %c0_66] : memref<4x128xf32, #tpu.memory_space<vmem>>, vector<1x128xf32>
    %cst_67 = arith.constant dense<0.000000e+00> : vector<1x128xf32>
    %254 = tpu.matmul %251, %250, %cst_67 {dimension_numbers = #tpu.dot_dimension_numbers<[1], [0], [0], [1], [0, 0, 1, 1], [], []>} : vector<1x32xf32>, vector<32x128xf32>, vector<1x128xf32> -> vector<1x128xf32>
    %255 = arith.addf %253, %254 : vector<1x128xf32>
    %256 = vector.extract_strided_slice %255 {offsets = [0, 0], sizes = [1, 96], strides = [1, 1]} : vector<1x128xf32> to vector<1x96xf32>
    %257 = arith.negf %256 : vector<1x96xf32>
    %258 = math.exp %257 : vector<1x96xf32>
    %cst_68 = arith.constant 1.000000e+00 : f32
    %259 = vector.broadcast %cst_68 : f32 to vector<1x96xf32>
    %260 = arith.addf %259, %258 : vector<1x96xf32>
    %261 = arith.divf %259, %260 : vector<1x96xf32>
    %262 = vector.extract_strided_slice %255 {offsets = [0, 96], sizes = [1, 32], strides = [1, 1]} : vector<1x128xf32> to vector<1x32xf32>
    %263 = math.tanh %262 : vector<1x32xf32>
    %264 = vector.extract_strided_slice %261 {offsets = [0, 0], sizes = [1, 32], strides = [1, 1]} : vector<1x96xf32> to vector<1x32xf32>
    %265 = vector.extract_strided_slice %261 {offsets = [0, 32], sizes = [1, 32], strides = [1, 1]} : vector<1x96xf32> to vector<1x32xf32>
    %266 = vector.extract_strided_slice %261 {offsets = [0, 64], sizes = [1, 32], strides = [1, 1]} : vector<1x96xf32> to vector<1x32xf32>
    %267 = arith.mulf %265, %251 : vector<1x32xf32>
    %268 = arith.mulf %264, %263 : vector<1x32xf32>
    %269 = arith.addf %267, %268 : vector<1x32xf32>
    %270 = math.tanh %269 : vector<1x32xf32>
    %271 = arith.mulf %266, %270 : vector<1x32xf32>
    %272 = arith.index_cast %c0_i32_65 : i32 to index
    %c0_69 = arith.constant 0 : index
    %273 = vector.load %arg11[%272, %c0_69] : memref<4x32xf32, #tpu.memory_space<vmem>>, vector<1x32xf32>
    tpu.vector_store %arg11[%272, %c0_69], %271 {strides = array<i32>} : memref<4x32xf32, #tpu.memory_space<vmem>>, vector<1x32xf32>,
    %c1_i32_70 = arith.constant 1 : i32
    %274 = arith.index_cast %c1_i32_70 : i32 to index
    %c0_71 = arith.constant 0 : index
    %275 = vector.load %arg10[%274, %c0_71] : memref<4x128xf32, #tpu.memory_space<vmem>>, vector<1x128xf32>
    %cst_72 = arith.constant dense<0.000000e+00> : vector<1x128xf32>
    %276 = tpu.matmul %271, %250, %cst_72 {dimension_numbers = #tpu.dot_dimension_numbers<[1], [0], [0], [1], [0, 0, 1, 1], [], []>} : vector<1x32xf32>, vector<32x128xf32>, vector<1x128xf32> -> vector<1x128xf32>
    %277 = arith.addf %275, %276 : vector<1x128xf32>
    %278 = vector.extract_strided_slice %277 {offsets = [0, 0], sizes = [1, 96], strides = [1, 1]} : vector<1x128xf32> to vector<1x96xf32>
    %279 = arith.negf %278 : vector<1x96xf32>
    %280 = math.exp %279 : vector<1x96xf32>
    %cst_73 = arith.constant 1.000000e+00 : f32
    %281 = vector.broadcast %cst_73 : f32 to vector<1x96xf32>
    %282 = arith.addf %281, %280 : vector<1x96xf32>
    %283 = arith.divf %281, %282 : vector<1x96xf32>
    %284 = vector.extract_strided_slice %277 {offsets = [0, 96], sizes = [1, 32], strides = [1, 1]} : vector<1x128xf32> to vector<1x32xf32>
    %285 = math.tanh %284 : vector<1x32xf32>
    %286 = vector.extract_strided_slice %283 {offsets = [0, 0], sizes = [1, 32], strides = [1, 1]} : vector<1x96xf32> to vector<1x32xf32>
    %287 = vector.extract_strided_slice %283 {offsets = [0, 32], sizes = [1, 32], strides = [1, 1]} : vector<1x96xf32> to vector<1x32xf32>
    %288 = vector.extract_strided_slice %283 {offsets = [0, 64], sizes = [1, 32], strides = [1, 1]} : vector<1x96xf32> to vector<1x32xf32>
    %289 = arith.mulf %287, %269 : vector<1x32xf32>
    %290 = arith.mulf %286, %285 : vector<1x32xf32>
    %291 = arith.addf %289, %290 : vector<1x32xf32>
    %292 = math.tanh %291 : vector<1x32xf32>
    %293 = arith.mulf %288, %292 : vector<1x32xf32>
    %294 = arith.index_cast %c1_i32_70 : i32 to index
    %c0_74 = arith.constant 0 : index
    %295 = vector.load %arg11[%294, %c0_74] : memref<4x32xf32, #tpu.memory_space<vmem>>, vector<1x32xf32>
    tpu.vector_store %arg11[%294, %c0_74], %293 {strides = array<i32>} : memref<4x32xf32, #tpu.memory_space<vmem>>, vector<1x32xf32>,
    %c2_i32_75 = arith.constant 2 : i32
    %296 = arith.index_cast %c2_i32_75 : i32 to index
    %c0_76 = arith.constant 0 : index
    %297 = vector.load %arg10[%296, %c0_76] : memref<4x128xf32, #tpu.memory_space<vmem>>, vector<1x128xf32>
    %cst_77 = arith.constant dense<0.000000e+00> : vector<1x128xf32>
    %298 = tpu.matmul %293, %250, %cst_77 {dimension_numbers = #tpu.dot_dimension_numbers<[1], [0], [0], [1], [0, 0, 1, 1], [], []>} : vector<1x32xf32>, vector<32x128xf32>, vector<1x128xf32> -> vector<1x128xf32>
    %299 = arith.addf %297, %298 : vector<1x128xf32>
    %300 = vector.extract_strided_slice %299 {offsets = [0, 0], sizes = [1, 96], strides = [1, 1]} : vector<1x128xf32> to vector<1x96xf32>
    %301 = arith.negf %300 : vector<1x96xf32>
    %302 = math.exp %301 : vector<1x96xf32>
    %cst_78 = arith.constant 1.000000e+00 : f32
    %303 = vector.broadcast %cst_78 : f32 to vector<1x96xf32>
    %304 = arith.addf %303, %302 : vector<1x96xf32>
    %305 = arith.divf %303, %304 : vector<1x96xf32>
    %306 = vector.extract_strided_slice %299 {offsets = [0, 96], sizes = [1, 32], strides = [1, 1]} : vector<1x128xf32> to vector<1x32xf32>
    %307 = math.tanh %306 : vector<1x32xf32>
    %308 = vector.extract_strided_slice %305 {offsets = [0, 0], sizes = [1, 32], strides = [1, 1]} : vector<1x96xf32> to vector<1x32xf32>
    %309 = vector.extract_strided_slice %305 {offsets = [0, 32], sizes = [1, 32], strides = [1, 1]} : vector<1x96xf32> to vector<1x32xf32>
    %310 = vector.extract_strided_slice %305 {offsets = [0, 64], sizes = [1, 32], strides = [1, 1]} : vector<1x96xf32> to vector<1x32xf32>
    %311 = arith.mulf %309, %291 : vector<1x32xf32>
    %312 = arith.mulf %308, %307 : vector<1x32xf32>
    %313 = arith.addf %311, %312 : vector<1x32xf32>
    %314 = math.tanh %313 : vector<1x32xf32>
    %315 = arith.mulf %310, %314 : vector<1x32xf32>
    %316 = arith.index_cast %c2_i32_75 : i32 to index
    %c0_79 = arith.constant 0 : index
    %317 = vector.load %arg11[%316, %c0_79] : memref<4x32xf32, #tpu.memory_space<vmem>>, vector<1x32xf32>
    tpu.vector_store %arg11[%316, %c0_79], %315 {strides = array<i32>} : memref<4x32xf32, #tpu.memory_space<vmem>>, vector<1x32xf32>,
    %c3_i32_80 = arith.constant 3 : i32
    %318 = arith.index_cast %c3_i32_80 : i32 to index
    %c0_81 = arith.constant 0 : index
    %319 = vector.load %arg10[%318, %c0_81] : memref<4x128xf32, #tpu.memory_space<vmem>>, vector<1x128xf32>
    %cst_82 = arith.constant dense<0.000000e+00> : vector<1x128xf32>
    %320 = tpu.matmul %315, %250, %cst_82 {dimension_numbers = #tpu.dot_dimension_numbers<[1], [0], [0], [1], [0, 0, 1, 1], [], []>} : vector<1x32xf32>, vector<32x128xf32>, vector<1x128xf32> -> vector<1x128xf32>
    %321 = arith.addf %319, %320 : vector<1x128xf32>
    %322 = vector.extract_strided_slice %321 {offsets = [0, 0], sizes = [1, 96], strides = [1, 1]} : vector<1x128xf32> to vector<1x96xf32>
    %323 = arith.negf %322 : vector<1x96xf32>
    %324 = math.exp %323 : vector<1x96xf32>
    %cst_83 = arith.constant 1.000000e+00 : f32
    %325 = vector.broadcast %cst_83 : f32 to vector<1x96xf32>
    %326 = arith.addf %325, %324 : vector<1x96xf32>
    %327 = arith.divf %325, %326 : vector<1x96xf32>
    %328 = vector.extract_strided_slice %321 {offsets = [0, 96], sizes = [1, 32], strides = [1, 1]} : vector<1x128xf32> to vector<1x32xf32>
    %329 = math.tanh %328 : vector<1x32xf32>
    %330 = vector.extract_strided_slice %327 {offsets = [0, 0], sizes = [1, 32], strides = [1, 1]} : vector<1x96xf32> to vector<1x32xf32>
    %331 = vector.extract_strided_slice %327 {offsets = [0, 32], sizes = [1, 32], strides = [1, 1]} : vector<1x96xf32> to vector<1x32xf32>
    %332 = vector.extract_strided_slice %327 {offsets = [0, 64], sizes = [1, 32], strides = [1, 1]} : vector<1x96xf32> to vector<1x32xf32>
    %333 = arith.mulf %331, %313 : vector<1x32xf32>
    %334 = arith.mulf %330, %329 : vector<1x32xf32>
    %335 = arith.addf %333, %334 : vector<1x32xf32>
    %336 = math.tanh %335 : vector<1x32xf32>
    %337 = arith.mulf %332, %336 : vector<1x32xf32>
    %338 = arith.index_cast %c3_i32_80 : i32 to index
    %c0_84 = arith.constant 0 : index
    %339 = vector.load %arg11[%338, %c0_84] : memref<4x32xf32, #tpu.memory_space<vmem>>, vector<1x32xf32>
    tpu.vector_store %arg11[%338, %c0_84], %337 {strides = array<i32>} : memref<4x32xf32, #tpu.memory_space<vmem>>, vector<1x32xf32>,
    %c4_i32_85 = arith.constant 4 : i32
    %c0_86 = arith.constant 0 : index
    %c0_87 = arith.constant 0 : index
    %340 = vector.load %arg11[%c0_86, %c0_87] : memref<4x32xf32, #tpu.memory_space<vmem>>, vector<4x32xf32>
    %c0_88 = arith.constant 0 : index
    %c0_89 = arith.constant 0 : index
    %341 = vector.load %arg7[%c0_88, %c0_89] : memref<32x3xf32, #tpu.memory_space<vmem>>, vector<32x3xf32>
    %cst_90 = arith.constant dense<0.000000e+00> : vector<4x3xf32>
    %342 = tpu.matmul %340, %341, %cst_90 {dimension_numbers = #tpu.dot_dimension_numbers<[1], [0], [0], [1], [0, 0, 1, 1], [], []>} : vector<4x32xf32>, vector<32x3xf32>, vector<4x3xf32> -> vector<4x3xf32>
    %c0_91 = arith.constant 0 : index
    %c0_92 = arith.constant 0 : index
    %343 = vector.load %arg8[%c0_91, %c0_92] : memref<1x3xf32, #tpu.memory_space<vmem>>, vector<1x3xf32>
    %344 = vector.broadcast %343 : vector<1x3xf32> to vector<4x3xf32>
    %345 = arith.addf %342, %344 : vector<4x3xf32>
    %c0_93 = arith.constant 0 : index
    %c0_94 = arith.constant 0 : index
    %346 = vector.load %arg9[%c0_93, %c0_94] : memref<4x3xf32, #tpu.memory_space<vmem>>, vector<4x3xf32>
    tpu.vector_store %arg9[%c0_93, %c0_94], %345 {strides = array<i32>} : memref<4x3xf32, #tpu.memory_space<vmem>>, vector<4x3xf32>,
    return
  }
  func.func @transform_0(%arg0: i32) -> (i32, i32, i32) {
    %c0_i32 = arith.constant 0 : i32
    %c0_i32_0 = arith.constant 0 : i32
    %c0_i32_1 = arith.constant 0 : i32
    %c0_i32_2 = arith.constant 0 : i32
    return %c0_i32, %c0_i32_0, %c0_i32_1 : i32, i32, i32
  }
  func.func @transform_1(%arg0: i32) -> (i32, i32) {
    %c0_i32 = arith.constant 0 : i32
    %c0_i32_0 = arith.constant 0 : i32
    %c0_i32_1 = arith.constant 0 : i32
    return %c0_i32, %c0_i32_0 : i32, i32
  }
  func.func @transform_2(%arg0: i32) -> (i32, i32, i32) {
    %c0_i32 = arith.constant 0 : i32
    %c0_i32_0 = arith.constant 0 : i32
    %c0_i32_1 = arith.constant 0 : i32
    %c0_i32_2 = arith.constant 0 : i32
    return %c0_i32, %c0_i32_0, %c0_i32_1 : i32, i32, i32
  }
  func.func @transform_3(%arg0: i32) -> (i32, i32) {
    %c0_i32 = arith.constant 0 : i32
    %c0_i32_0 = arith.constant 0 : i32
    %c0_i32_1 = arith.constant 0 : i32
    return %c0_i32, %c0_i32_0 : i32, i32
  }
  func.func @transform_4(%arg0: i32) -> (i32, i32) {
    %c0_i32 = arith.constant 0 : i32
    %c0_i32_0 = arith.constant 0 : i32
    %c0_i32_1 = arith.constant 0 : i32
    return %c0_i32, %c0_i32_0 : i32, i32
  }
  func.func @transform_5(%arg0: i32) -> (i32, i32) {
    %c0_i32 = arith.constant 0 : i32
    %c0_i32_0 = arith.constant 0 : i32
    %c0_i32_1 = arith.constant 0 : i32
    return %c0_i32, %c0_i32_0 : i32, i32
  }
  func.func @transform_6(%arg0: i32) -> (i32, i32) {
    %c0_i32 = arith.constant 0 : i32
    %c0_i32_0 = arith.constant 0 : i32
    %c0_i32_1 = arith.constant 0 : i32
    return %c0_i32, %c0_i32_0 : i32, i32
  }
  func.func @transform_7(%arg0: i32) -> (i32, i32) {
    %c0_i32 = arith.constant 0 : i32
    %c0_i32_0 = arith.constant 0 : i32
    %c0_i32_1 = arith.constant 0 : i32
    return %c0_i32, %c0_i32_0 : i32, i32
  }
  func.func @transform_8(%arg0: i32) -> (i32, i32) {
    %c0_i32 = arith.constant 0 : i32
    %c0_i32_0 = arith.constant 0 : i32
    %c0_i32_1 = arith.constant 0 : i32
    return %c0_i32, %c0_i32_0 : i32, i32
  }
}

</mosaic_0001>

<llo_original>
// kernel: tpu_custom_call.1
$region0: #{tpu_custom_call.1}
  #allocation0 [shape = 'u32[]', space=smem, size = 0x4, offset = 0x4, fixed_abs, tag = 'smem constant byte address 0x4 - core index']
  #allocation1 [shape = 'u32[72,128]{1,0:T(1,128)}', space=vmem, size = 0x9000, scoped, tag = 'internal scratch']
  #allocation2 [shape = 'f32[4,128]{1,0:T(4,128)}', space=vmem, size = 0x800, scoped, tag = 'scratch operand']
  #allocation3 [shape = 'f32[4,32]{1,0:T(4,128)}', space=vmem, size = 0x800, scoped, tag = 'scratch operand']
  %s0 = inlined_call_operand.vmem [shape: f32[9,4,64], index: 0, kind: input, shape index: {}]
  %s1 = inlined_call_operand.hbm [shape: f32[16,64], index: 1, kind: input, shape index: {}]
  %s2 = inlined_call_operand.vmem [shape: f32[9,4,1], index: 2, kind: input, shape index: {}]
  %s3 = inlined_call_operand.vmem [shape: f32[4,128], index: 3, kind: input, shape index: {}]
  %s4 = inlined_call_operand.hbm [shape: f32[16,128], index: 4, kind: input, shape index: {}]
  %s5 = inlined_call_operand.vmem [shape: f32[32,128], index: 5, kind: input, shape index: {}]
  %s6 = inlined_call_operand.vmem [shape: f32[32,3], index: 6, kind: input, shape index: {}]
  %s7 = inlined_call_operand.vmem [shape: f32[1,3], index: 7, kind: input, shape index: {}]
  %s8 = inlined_call_operand.hbm [shape: f32[4,3], index: 8, kind: output, shape index: {}]
  %s9 = sld [smem:[#allocation0]]
  $region50: #{tpu_custom_call.1} parent=0
    _
  %s11 = ssub.s32 1, %s9
  %s12 = scalar_select 0, %s11, %s9
  $region1: #{tpu_custom_call.1} parent=0
    #allocation4 [shape = 'u8[8192]{0}', space=vmem, size = 0x2000, scoped, tag = 'input window, operand 1, single buffered']
    #allocation5 [shape = 's32[1]{0}', space=sflag, size = 0x4, scoped, tag = 'scoped memory for tpu_custom_call.1']
    #allocation6 [shape = 's32[1]{0}', space=sflag, size = 0x4, scoped, tag = 'scoped memory for tpu_custom_call.1']
    #allocation7 [shape = 'u8[8192]{0}', space=vmem, size = 0x2000, scoped, tag = 'input window, operand 4, single buffered']
    #allocation8 [shape = 's32[1]{0}', space=sflag, size = 0x4, scoped, tag = 'scoped memory for tpu_custom_call.1']
    #allocation9 [shape = 'u8[2048]{0}', space=vmem, size = 0x800, scoped, tag = 'output window, operand 0, single buffered']
    %13 = vsyncpa [#allocation5], 0
    %14 = vsyncpa [#allocation8], 0
    %15 = vsyncpa [#allocation6], 0
    // Predicated region
    $region2: #{tpu_custom_call.1} parent=1 // pred_check
      _
    $region3: #{tpu_custom_call.1} parent=1 // pred_check_branch
      %17 = sbr.rel (0) target = $region5
    $region4: #{tpu_custom_call.1} parent=1 // pred_region
      _
    $region5: #{tpu_custom_call.1} parent=1 // pred_fallthru
      _
    // Predicated region
    $region6: #{tpu_custom_call.1} parent=1 // pred_check
      _
    $region7: #{tpu_custom_call.1} parent=1 // pred_check_branch
      %19 = sbr.rel (0) target = $region9
    $region8: #{tpu_custom_call.1} parent=1 // pred_region
      %21 = vsyncadd [#allocation5], 0
      %s22 = sshll.u32 %s1, 4
      %s23 = int_to_ptr.hbm [resolvable:$true] %s22
      %s24 = sshll.u32 [#allocation4], 4
      %s25 = int_to_ptr.vmem [resolvable:$true] %s24
      %30 = dma.hbm_to_vmem [thread:$0]  %s23, 256, %s25, [#allocation5], 128, 128, 8
    $region9: #{tpu_custom_call.1} parent=1 // pred_fallthru
      _
    // Predicated region
    $region10: #{tpu_custom_call.1} parent=1 // pred_check
      _
    $region11: #{tpu_custom_call.1} parent=1 // pred_check_branch
      %32 = sbr.rel (0) target = $region13
    $region12: #{tpu_custom_call.1} parent=1 // pred_region
      _
    $region13: #{tpu_custom_call.1} parent=1 // pred_fallthru
      _
    // Predicated region
    $region14: #{tpu_custom_call.1} parent=1 // pred_check
      _
    $region15: #{tpu_custom_call.1} parent=1 // pred_check_branch
      %34 = sbr.rel (0) target = $region17
    $region16: #{tpu_custom_call.1} parent=1 // pred_region
      _
    $region17: #{tpu_custom_call.1} parent=1 // pred_fallthru
      _
    // Predicated region
    $region18: #{tpu_custom_call.1} parent=1 // pred_check
      _
    $region19: #{tpu_custom_call.1} parent=1 // pred_check_branch
      %36 = sbr.rel (0) target = $region21
    $region20: #{tpu_custom_call.1} parent=1 // pred_region
      %38 = vsyncadd [#allocation8], 0
      %s39 = sshll.u32 %s4, 4
      %s40 = int_to_ptr.hbm [resolvable:$true] %s39
      %s41 = sshll.u32 [#allocation7], 4
      %s42 = int_to_ptr.vmem [resolvable:$true] %s41
      %47 = dma.hbm_to_vmem [thread:$0]  %s40, 256, %s42, [#allocation8], 128, 128, 8
    $region21: #{tpu_custom_call.1} parent=1 // pred_fallthru
      _
    // Predicated region
    $region22: #{tpu_custom_call.1} parent=1 // pred_check
      _
    $region23: #{tpu_custom_call.1} parent=1 // pred_check_branch
      %49 = sbr.rel (0) target = $region25
    $region24: #{tpu_custom_call.1} parent=1 // pred_region
      _
    $region25: #{tpu_custom_call.1} parent=1 // pred_fallthru
      _
    // Predicated region
    $region26: #{tpu_custom_call.1} parent=1 // pred_check
      _
    $region27: #{tpu_custom_call.1} parent=1 // pred_check_branch
      %51 = sbr.rel (0) target = $region29
    $region28: #{tpu_custom_call.1} parent=1 // pred_region
      _
    $region29: #{tpu_custom_call.1} parent=1 // pred_fallthru
      _
    // Predicated region
    $region30: #{tpu_custom_call.1} parent=1 // pred_check
      _
    $region31: #{tpu_custom_call.1} parent=1 // pred_check_branch
      %53 = sbr.rel (0) target = $region33
    $region32: #{tpu_custom_call.1} parent=1 // pred_region
      _
    $region33: #{tpu_custom_call.1} parent=1 // pred_fallthru
      _
    // Predicated region
    $region34: #{tpu_custom_call.1} parent=1 // pred_check
      _
    $region35: #{tpu_custom_call.1} parent=1 // pred_check_branch
      %55 = sbr.rel (0) target = $region37
    $region36: #{tpu_custom_call.1} parent=1 // pred_region
      %57 = dma.done [#allocation5], 256
    $region37: #{tpu_custom_call.1} parent=1 // pred_fallthru
      _
    // Predicated region
    $region38: #{tpu_custom_call.1} parent=1 // pred_check
      _
    $region39: #{tpu_custom_call.1} parent=1 // pred_check_branch
      %59 = sbr.rel (0) target = $region41
    $region40: #{tpu_custom_call.1} parent=1 // pred_region
      %61 = dma.done [#allocation8], 256
    $region41: #{tpu_custom_call.1} parent=1 // pred_fallthru
      _
    %v62 = vld [vmem:[#allocation4] sm:$0xff]
    %v63 = vld [vmem:[#allocation4 + $0x8] sm:$0xff]
    %v64 = vld [vmem:[%s0] sm:$0xf]
    %vm65 = vcmask 130048
    %v67 = vsel %vm65, 0.0, 0
    %69 = vmatpush.msra.mxu0 0.0
    %70 = vmatpush.msra.mxu0 0.0
    %71 = vmatpush.msra.mxu0 0.0
    %72 = vmatpush.msra.mxu0 0.0
    %73 = vmatpush.msra.mxu0 0.0
    %74 = vmatpush.msra.mxu0 0.0
    %75 = vmatpush.msra.mxu0 0.0
    %76 = vmatpush.msra.mxu0 0.0
    %77 = vmatpush.msra.mxu0 0.0
    %78 = vmatpush.msra.mxu0 0.0
    %79 = vmatpush.msra.mxu0 0.0
    %80 = vmatpush.msra.mxu0 0.0
    %81 = vmatpush.msra.mxu0 0.0
    %82 = vmatpush.msra.mxu0 0.0
    %83 = vmatpush.msra.mxu0 %v63
    %84 = vmatpush.msra.mxu0 %v62
    %85 = vmatmul.f32.gmra.mxu0 %v67
    %v86 = vpop.f32.mrf.mxu0
    %v87 = vadd.f32 0.0, %v86
    %88 = vdwg.mxu0
    %v89 = vadd.f32 %v64, %v87
    %v90 = vxor.u32 %v89, 2147483648
    %v91 = vmul.f32 %v90, 1.442695
    %v92 = vpow.pop %v91
    %v93 = vadd.f32 %v92, 1.0
    %v94 = vrcp.pop %v93
    %v95 = vmul.f32 %v93, %v94
    %v96 = vsub.f32 1.0, %v95
    %v97 = vmul.f32 %v94, %v96
    %v98 = vadd.f32 %v94, %v97
    %vm99 = vweird.f32 %v93
    %vm100 = vweird.f32 %v94
    %vm101 = vmor %vm99, %vm100
    %v102 = vsel %vm101, %v94, %v98
    %v103 = vand.u32 2147483647, %v93
    %vm104 = vcmp.eq.f32.partialorder %v103, 8.507059e+37
    %v105 = vand.u32 %v93, 2147483648
    %v106 = vor.u32 1.1754944e-38, %v105
    %v107 = vsel %vm104, %v106, %v102
    %v108 = vmul.f32 1.0, %v107
    %v109 = vtanh.pop %v89
    %v110 = vmul.f32 %v108, 0.0
    %112 = vrot.lane.b32.xlu0 %v109, 80
    %v113 = vpop.permute.xlu0 %112
    %v115 = vmul.f32 %v108, %v113
    %117 = vrot.lane.b32.xlu0 %v115, 16
    %v118 = vpop.permute.xlu0 %117
    %v120 = vadd.f32 %v110, %v118
    %v121 = vtanh.pop %v120
    %123 = vrot.lane.b32.xlu0 %v121, 16
    %v124 = vpop.permute.xlu0 %123
    %v126 = vmul.f32 %v108, %v124
    %v127 = vld [vmem:[%s2] sm:$0xf]
    %129 = vset.pattern.permute.xlu0 0
    %130 = vperm.xlu0 %129, %v127
    %v131 = vpop.permute.xlu0 %130
    %v133 = vmul.f32 %v131, %v126
    %v134 = vadd.f32 %v133, 0.0
    %s135 = scalar_lea.vmem %s0, 4
    %v136 = vld [vmem:[%s135] sm:$0xf]
    %138 = vrot.lane.b32.xlu0 %v126, 96
    %v139 = vpop.permute.xlu0 %138
    %v140 = vsel %vm65, %v139, 0
    %142 = vmatpush.msra.mxu0 0.0
    %143 = vmatpush.msra.mxu0 0.0
    %144 = vmatpush.msra.mxu0 0.0
    %145 = vmatpush.msra.mxu0 0.0
    %146 = vmatpush.msra.mxu0 0.0
    %147 = vmatpush.msra.mxu0 0.0
    %148 = vmatpush.msra.mxu0 0.0
    %149 = vmatpush.msra.mxu0 0.0
    %150 = vmatpush.msra.mxu0 0.0
    %151 = vmatpush.msra.mxu0 0.0
    %152 = vmatpush.msra.mxu0 0.0
    %153 = vmatpush.msra.mxu0 0.0
    %154 = vmatpush.msra.mxu0 0.0
    %155 = vmatpush.msra.mxu0 0.0
    %156 = vmatpush.msra.mxu0 %v63
    %157 = vmatpush.msra.mxu0 %v62
    %158 = vmatmul.f32.gmra.mxu0 %v140
    %v159 = vpop.f32.mrf.mxu0
    %v160 = vadd.f32 0.0, %v159
    %161 = vdwg.mxu0
    %v162 = vadd.f32 %v136, %v160
    %v163 = vxor.u32 %v162, 2147483648
    %v164 = vmul.f32 %v163, 1.442695
    %v165 = vpow.pop %v164
    %v166 = vadd.f32 %v165, 1.0
    %v167 = vrcp.pop %v166
    %v168 = vmul.f32 %v166, %v167
    %v169 = vsub.f32 1.0, %v168
    %v170 = vmul.f32 %v167, %v169
    %v171 = vadd.f32 %v167, %v170
    %vm172 = vweird.f32 %v166
    %vm173 = vweird.f32 %v167
    %vm174 = vmor %vm172, %vm173
    %v175 = vsel %vm174, %v167, %v171
    %v176 = vand.u32 2147483647, %v166
    %vm177 = vcmp.eq.f32.partialorder %v176, 8.507059e+37
    %v178 = vand.u32 %v166, 2147483648
    %v179 = vor.u32 1.1754944e-38, %v178
    %v180 = vsel %vm177, %v179, %v175
    %v181 = vmul.f32 1.0, %v180
    %v182 = vtanh.pop %v162
    %v183 = vmul.f32 %v181, %v120
    %185 = vrot.lane.b32.xlu0 %v182, 80
    %v186 = vpop.permute.xlu0 %185
    %v188 = vmul.f32 %v181, %v186
    %190 = vrot.lane.b32.xlu0 %v188, 16
    %v191 = vpop.permute.xlu0 %190
    %v193 = vadd.f32 %v183, %v191
    %v194 = vtanh.pop %v193
    %196 = vrot.lane.b32.xlu0 %v194, 16
    %v197 = vpop.permute.xlu0 %196
    %v199 = vmul.f32 %v181, %v197
    %s200 = scalar_lea.vmem %s2, 4
    %v201 = vld [vmem:[%s200] sm:$0xf]
    %203 = vset.pattern.permute.xlu0 0
    %204 = vperm.xlu0 %203, %v201
    %v205 = vpop.permute.xlu0 %204
    %v207 = vmul.f32 %v205, %v199
    %v208 = vadd.f32 %v134, %v207
    %s209 = scalar_lea.vmem %s0, 8
    %v210 = vld [vmem:[%s209] sm:$0xf]
    %212 = vrot.lane.b32.xlu0 %v199, 96
    %v213 = vpop.permute.xlu0 %212
    %v214 = vsel %vm65, %v213, 0
    %216 = vmatpush.msra.mxu0 0.0
    %217 = vmatpush.msra.mxu0 0.0
    %218 = vmatpush.msra.mxu0 0.0
    %219 = vmatpush.msra.mxu0 0.0
    %220 = vmatpush.msra.mxu0 0.0
    %221 = vmatpush.msra.mxu0 0.0
    %222 = vmatpush.msra.mxu0 0.0
    %223 = vmatpush.msra.mxu0 0.0
    %224 = vmatpush.msra.mxu0 0.0
    %225 = vmatpush.msra.mxu0 0.0
    %226 = vmatpush.msra.mxu0 0.0
    %227 = vmatpush.msra.mxu0 0.0
    %228 = vmatpush.msra.mxu0 0.0
    %229 = vmatpush.msra.mxu0 0.0
    %230 = vmatpush.msra.mxu0 %v63
    %231 = vmatpush.msra.mxu0 %v62
    %232 = vmatmul.f32.gmra.mxu0 %v214
    %v233 = vpop.f32.mrf.mxu0
    %v234 = vadd.f32 0.0, %v233
    %235 = vdwg.mxu0
    %v236 = vadd.f32 %v210, %v234
    %v237 = vxor.u32 %v236, 2147483648
    %v238 = vmul.f32 %v237, 1.442695
    %v239 = vpow.pop %v238
    %v240 = vadd.f32 %v239, 1.0
    %v241 = vrcp.pop %v240
    %v242 = vmul.f32 %v240, %v241
    %v243 = vsub.f32 1.0, %v242
    %v244 = vmul.f32 %v241, %v243
    %v245 = vadd.f32 %v241, %v244
    %vm246 = vweird.f32 %v240
    %vm247 = vweird.f32 %v241
    %vm248 = vmor %vm246, %vm247
    %v249 = vsel %vm248, %v241, %v245
    %v250 = vand.u32 2147483647, %v240
    %vm251 = vcmp.eq.f32.partialorder %v250, 8.507059e+37
    %v252 = vand.u32 %v240, 2147483648
    %v253 = vor.u32 1.1754944e-38, %v252
    %v254 = vsel %vm251, %v253, %v249
    %v255 = vmul.f32 1.0, %v254
    %v256 = vtanh.pop %v236
    %v257 = vmul.f32 %v255, %v193
    %259 = vrot.lane.b32.xlu0 %v256, 80
    %v260 = vpop.permute.xlu0 %259
    %v262 = vmul.f32 %v255, %v260
    %264 = vrot.lane.b32.xlu0 %v262, 16
    %v265 = vpop.permute.xlu0 %264
    %v267 = vadd.f32 %v257, %v265
    %v268 = vtanh.pop %v267
    %270 = vrot.lane.b32.xlu0 %v268, 16
    %v271 = vpop.permute.xlu0 %270
    %v273 = vmul.f32 %v255, %v271
    %s274 = scalar_lea.vmem %s2, 8
    %v275 = vld [vmem:[%s274] sm:$0xf]
    %277 = vset.pattern.permute.xlu0 0
    %278 = vperm.xlu0 %277, %v275
    %v279 = vpop.permute.xlu0 %278
    %v281 = vmul.f32 %v279, %v273
    %v282 = vadd.f32 %v208, %v281
    %s283 = scalar_lea.vmem %s0, 12
    %v284 = vld [vmem:[%s283] sm:$0xf]
    %286 = vrot.lane.b32.xlu0 %v273, 96
    %v287 = vpop.permute.xlu0 %286
    %v288 = vsel %vm65, %v287, 0
    %290 = vmatpush.msra.mxu0 0.0
    %291 = vmatpush.msra.mxu0 0.0
    %292 = vmatpush.msra.mxu0 0.0
    %293 = vmatpush.msra.mxu0 0.0
    %294 = vmatpush.msra.mxu0 0.0
    %295 = vmatpush.msra.mxu0 0.0
    %296 = vmatpush.msra.mxu0 0.0
    %297 = vmatpush.msra.mxu0 0.0
    %298 = vmatpush.msra.mxu0 0.0
    %299 = vmatpush.msra.mxu0 0.0
    %300 = vmatpush.msra.mxu0 0.0
    %301 = vmatpush.msra.mxu0 0.0
    %302 = vmatpush.msra.mxu0 0.0
    %303 = vmatpush.msra.mxu0 0.0
    %304 = vmatpush.msra.mxu0 %v63
    %305 = vmatpush.msra.mxu0 %v62
    %306 = vmatmul.f32.gmra.mxu0 %v288
    %v307 = vpop.f32.mrf.mxu0
    %v308 = vadd.f32 0.0, %v307
    %309 = vdwg.mxu0
    %v310 = vadd.f32 %v284, %v308
    %v311 = vxor.u32 %v310, 2147483648
    %v312 = vmul.f32 %v311, 1.442695
    %v313 = vpow.pop %v312
    %v314 = vadd.f32 %v313, 1.0
    %v315 = vrcp.pop %v314
    %v316 = vmul.f32 %v314, %v315
    %v317 = vsub.f32 1.0, %v316
    %v318 = vmul.f32 %v315, %v317
    %v319 = vadd.f32 %v315, %v318
    %vm320 = vweird.f32 %v314
    %vm321 = vweird.f32 %v315
    %vm322 = vmor %vm320, %vm321
    %v323 = vsel %vm322, %v315, %v319
    %v324 = vand.u32 2147483647, %v314
    %vm325 = vcmp.eq.f32.partialorder %v324, 8.507059e+37
    %v326 = vand.u32 %v314, 2147483648
    %v327 = vor.u32 1.1754944e-38, %v326
    %v328 = vsel %vm325, %v327, %v323
    %v329 = vmul.f32 1.0, %v328
    %v330 = vtanh.pop %v310
    %v331 = vmul.f32 %v329, %v267
    %333 = vrot.lane.b32.xlu0 %v330, 80
    %v334 = vpop.permute.xlu0 %333
    %v336 = vmul.f32 %v329, %v334
    %338 = vrot.lane.b32.xlu0 %v336, 16
    %v339 = vpop.permute.xlu0 %338
    %v341 = vadd.f32 %v331, %v339
    %v342 = vtanh.pop %v341
    %344 = vrot.lane.b32.xlu0 %v342, 16
    %v345 = vpop.permute.xlu0 %344
    %v347 = vmul.f32 %v329, %v345
    %s348 = scalar_lea.vmem %s2, 12
    %v349 = vld [vmem:[%s348] sm:$0xf]
    %351 = vset.pattern.permute.xlu0 0
    %352 = vperm.xlu0 %351, %v349
    %v353 = vpop.permute.xlu0 %352
    %v355 = vmul.f32 %v353, %v347
    %v356 = vadd.f32 %v282, %v355
    %s357 = scalar_lea.vmem %s0, 16
    %v358 = vld [vmem:[%s357] sm:$0xf]
    %360 = vrot.lane.b32.xlu0 %v347, 96
    %v361 = vpop.permute.xlu0 %360
    %v362 = vsel %vm65, %v361, 0
    %364 = vmatpush.msra.mxu0 0.0
    %365 = vmatpush.msra.mxu0 0.0
    %366 = vmatpush.msra.mxu0 0.0
    %367 = vmatpush.msra.mxu0 0.0
    %368 = vmatpush.msra.mxu0 0.0
    %369 = vmatpush.msra.mxu0 0.0
    %370 = vmatpush.msra.mxu0 0.0
    %371 = vmatpush.msra.mxu0 0.0
    %372 = vmatpush.msra.mxu0 0.0
    %373 = vmatpush.msra.mxu0 0.0
    %374 = vmatpush.msra.mxu0 0.0
    %375 = vmatpush.msra.mxu0 0.0
    %376 = vmatpush.msra.mxu0 0.0
    %377 = vmatpush.msra.mxu0 0.0
    %378 = vmatpush.msra.mxu0 %v63
    %379 = vmatpush.msra.mxu0 %v62
    %380 = vmatmul.f32.gmra.mxu0 %v362
    %v381 = vpop.f32.mrf.mxu0
    %v382 = vadd.f32 0.0, %v381
    %383 = vdwg.mxu0
    %v384 = vadd.f32 %v358, %v382
    %v385 = vxor.u32 %v384, 2147483648
    %v386 = vmul.f32 %v385, 1.442695
    %v387 = vpow.pop %v386
    %v388 = vadd.f32 %v387, 1.0
    %v389 = vrcp.pop %v388
    %v390 = vmul.f32 %v388, %v389
    %v391 = vsub.f32 1.0, %v390
    %v392 = vmul.f32 %v389, %v391
    %v393 = vadd.f32 %v389, %v392
    %vm394 = vweird.f32 %v388
    %vm395 = vweird.f32 %v389
    %vm396 = vmor %vm394, %vm395
    %v397 = vsel %vm396, %v389, %v393
    %v398 = vand.u32 2147483647, %v388
    %vm399 = vcmp.eq.f32.partialorder %v398, 8.507059e+37
    %v400 = vand.u32 %v388, 2147483648
    %v401 = vor.u32 1.1754944e-38, %v400
    %v402 = vsel %vm399, %v401, %v397
    %v403 = vmul.f32 1.0, %v402
    %v404 = vtanh.pop %v384
    %v405 = vmul.f32 %v403, %v341
    %407 = vrot.lane.b32.xlu0 %v404, 80
    %v408 = vpop.permute.xlu0 %407
    %v410 = vmul.f32 %v403, %v408
    %412 = vrot.lane.b32.xlu0 %v410, 16
    %v413 = vpop.permute.xlu0 %412
    %v415 = vadd.f32 %v405, %v413
    %v416 = vtanh.pop %v415
    %418 = vrot.lane.b32.xlu0 %v416, 16
    %v419 = vpop.permute.xlu0 %418
    %v421 = vmul.f32 %v403, %v419
    %s422 = scalar_lea.vmem %s2, 16
    %v423 = vld [vmem:[%s422] sm:$0xf]
    %425 = vset.pattern.permute.xlu0 0
    %426 = vperm.xlu0 %425, %v423
    %v427 = vpop.permute.xlu0 %426
    %v429 = vmul.f32 %v427, %v421
    %v430 = vadd.f32 %v356, %v429
    %s431 = scalar_lea.vmem %s0, 20
    %v432 = vld [vmem:[%s431] sm:$0xf]
    %434 = vrot.lane.b32.xlu0 %v421, 96
    %v435 = vpop.permute.xlu0 %434
    %v436 = vsel %vm65, %v435, 0
    %438 = vmatpush.msra.mxu0 0.0
    %439 = vmatpush.msra.mxu0 0.0
    %440 = vmatpush.msra.mxu0 0.0
    %441 = vmatpush.msra.mxu0 0.0
    %442 = vmatpush.msra.mxu0 0.0
    %443 = vmatpush.msra.mxu0 0.0
    %444 = vmatpush.msra.mxu0 0.0
    %445 = vmatpush.msra.mxu0 0.0
    %446 = vmatpush.msra.mxu0 0.0
    %447 = vmatpush.msra.mxu0 0.0
    %448 = vmatpush.msra.mxu0 0.0
    %449 = vmatpush.msra.mxu0 0.0
    %450 = vmatpush.msra.mxu0 0.0
    %451 = vmatpush.msra.mxu0 0.0
    %452 = vmatpush.msra.mxu0 %v63
    %453 = vmatpush.msra.mxu0 %v62
    %454 = vmatmul.f32.gmra.mxu0 %v436
    %v455 = vpop.f32.mrf.mxu0
    %v456 = vadd.f32 0.0, %v455
    %457 = vdwg.mxu0
    %v458 = vadd.f32 %v432, %v456
    %v459 = vxor.u32 %v458, 2147483648
    %v460 = vmul.f32 %v459, 1.442695
    %v461 = vpow.pop %v460
    %v462 = vadd.f32 %v461, 1.0
    %v463 = vrcp.pop %v462
    %v464 = vmul.f32 %v462, %v463
    %v465 = vsub.f32 1.0, %v464
    %v466 = vmul.f32 %v463, %v465
    %v467 = vadd.f32 %v463, %v466
    %vm468 = vweird.f32 %v462
    %vm469 = vweird.f32 %v463
    %vm470 = vmor %vm468, %vm469
    %v471 = vsel %vm470, %v463, %v467
    %v472 = vand.u32 2147483647, %v462
    %vm473 = vcmp.eq.f32.partialorder %v472, 8.507059e+37
    %v474 = vand.u32 %v462, 2147483648
    %v475 = vor.u32 1.1754944e-38, %v474
    %v476 = vsel %vm473, %v475, %v471
    %v477 = vmul.f32 1.0, %v476
    %v478 = vtanh.pop %v458
    %v479 = vmul.f32 %v477, %v415
    %481 = vrot.lane.b32.xlu0 %v478, 80
    %v482 = vpop.permute.xlu0 %481
    %v484 = vmul.f32 %v477, %v482
    %486 = vrot.lane.b32.xlu0 %v484, 16
    %v487 = vpop.permute.xlu0 %486
    %v489 = vadd.f32 %v479, %v487
    %v490 = vtanh.pop %v489
    %492 = vrot.lane.b32.xlu0 %v490, 16
    %v493 = vpop.permute.xlu0 %492
    %v495 = vmul.f32 %v477, %v493
    %s496 = scalar_lea.vmem %s2, 20
    %v497 = vld [vmem:[%s496] sm:$0xf]
    %499 = vset.pattern.permute.xlu0 0
    %500 = vperm.xlu0 %499, %v497
    %v501 = vpop.permute.xlu0 %500
    %v503 = vmul.f32 %v501, %v495
    %v504 = vadd.f32 %v430, %v503
    %s505 = scalar_lea.vmem %s0, 24
    %v506 = vld [vmem:[%s505] sm:$0xf]
    %508 = vrot.lane.b32.xlu0 %v495, 96
    %v509 = vpop.permute.xlu0 %508
    %v510 = vsel %vm65, %v509, 0
    %512 = vmatpush.msra.mxu0 0.0
    %513 = vmatpush.msra.mxu0 0.0
    %514 = vmatpush.msra.mxu0 0.0
    %515 = vmatpush.msra.mxu0 0.0
    %516 = vmatpush.msra.mxu0 0.0
    %517 = vmatpush.msra.mxu0 0.0
    %518 = vmatpush.msra.mxu0 0.0
    %519 = vmatpush.msra.mxu0 0.0
    %520 = vmatpush.msra.mxu0 0.0
    %521 = vmatpush.msra.mxu0 0.0
    %522 = vmatpush.msra.mxu0 0.0
    %523 = vmatpush.msra.mxu0 0.0
    %524 = vmatpush.msra.mxu0 0.0
    %525 = vmatpush.msra.mxu0 0.0
    %526 = vmatpush.msra.mxu0 %v63
    %527 = vmatpush.msra.mxu0 %v62
    %528 = vmatmul.f32.gmra.mxu0 %v510
    %v529 = vpop.f32.mrf.mxu0
    %v530 = vadd.f32 0.0, %v529
    %531 = vdwg.mxu0
    %v532 = vadd.f32 %v506, %v530
    %v533 = vxor.u32 %v532, 2147483648
    %v534 = vmul.f32 %v533, 1.442695
    %v535 = vpow.pop %v534
    %v536 = vadd.f32 %v535, 1.0
    %v537 = vrcp.pop %v536
    %v538 = vmul.f32 %v536, %v537
    %v539 = vsub.f32 1.0, %v538
    %v540 = vmul.f32 %v537, %v539
    %v541 = vadd.f32 %v537, %v540
    %vm542 = vweird.f32 %v536
    %vm543 = vweird.f32 %v537
    %vm544 = vmor %vm542, %vm543
    %v545 = vsel %vm544, %v537, %v541
    %v546 = vand.u32 2147483647, %v536
    %vm547 = vcmp.eq.f32.partialorder %v546, 8.507059e+37
    %v548 = vand.u32 %v536, 2147483648
    %v549 = vor.u32 1.1754944e-38, %v548
    %v550 = vsel %vm547, %v549, %v545
    %v551 = vmul.f32 1.0, %v550
    %v552 = vtanh.pop %v532
    %v553 = vmul.f32 %v551, %v489
    %555 = vrot.lane.b32.xlu0 %v552, 80
    %v556 = vpop.permute.xlu0 %555
    %v558 = vmul.f32 %v551, %v556
    %560 = vrot.lane.b32.xlu0 %v558, 16
    %v561 = vpop.permute.xlu0 %560
    %v563 = vadd.f32 %v553, %v561
    %v564 = vtanh.pop %v563
    %566 = vrot.lane.b32.xlu0 %v564, 16
    %v567 = vpop.permute.xlu0 %566
    %v569 = vmul.f32 %v551, %v567
    %s570 = scalar_lea.vmem %s2, 24
    %v571 = vld [vmem:[%s570] sm:$0xf]
    %573 = vset.pattern.permute.xlu0 0
    %574 = vperm.xlu0 %573, %v571
    %v575 = vpop.permute.xlu0 %574
    %v577 = vmul.f32 %v575, %v569
    %v578 = vadd.f32 %v504, %v577
    %s579 = scalar_lea.vmem %s0, 28
    %v580 = vld [vmem:[%s579] sm:$0xf]
    %582 = vrot.lane.b32.xlu0 %v569, 96
    %v583 = vpop.permute.xlu0 %582
    %v584 = vsel %vm65, %v583, 0
    %586 = vmatpush.msra.mxu0 0.0
    %587 = vmatpush.msra.mxu0 0.0
    %588 = vmatpush.msra.mxu0 0.0
    %589 = vmatpush.msra.mxu0 0.0
    %590 = vmatpush.msra.mxu0 0.0
    %591 = vmatpush.msra.mxu0 0.0
    %592 = vmatpush.msra.mxu0 0.0
    %593 = vmatpush.msra.mxu0 0.0
    %594 = vmatpush.msra.mxu0 0.0
    %595 = vmatpush.msra.mxu0 0.0
    %596 = vmatpush.msra.mxu0 0.0
    %597 = vmatpush.msra.mxu0 0.0
    %598 = vmatpush.msra.mxu0 0.0
    %599 = vmatpush.msra.mxu0 0.0
    %600 = vmatpush.msra.mxu0 %v63
    %601 = vmatpush.msra.mxu0 %v62
    %602 = vmatmul.f32.gmra.mxu0 %v584
    %v603 = vpop.f32.mrf.mxu0
    %v604 = vadd.f32 0.0, %v603
    %605 = vdwg.mxu0
    %v606 = vadd.f32 %v580, %v604
    %v607 = vxor.u32 %v606, 2147483648
    %v608 = vmul.f32 %v607, 1.442695
    %v609 = vpow.pop %v608
    %v610 = vadd.f32 %v609, 1.0
    %v611 = vrcp.pop %v610
    %v612 = vmul.f32 %v610, %v611
    %v613 = vsub.f32 1.0, %v612
    %v614 = vmul.f32 %v611, %v613
    %v615 = vadd.f32 %v611, %v614
    %vm616 = vweird.f32 %v610
    %vm617 = vweird.f32 %v611
    %vm618 = vmor %vm616, %vm617
    %v619 = vsel %vm618, %v611, %v615
    %v620 = vand.u32 2147483647, %v610
    %vm621 = vcmp.eq.f32.partialorder %v620, 8.507059e+37
    %v622 = vand.u32 %v610, 2147483648
    %v623 = vor.u32 1.1754944e-38, %v622
    %v624 = vsel %vm621, %v623, %v619
    %v625 = vmul.f32 1.0, %v624
    %v626 = vtanh.pop %v606
    %v627 = vmul.f32 %v625, %v563
    %629 = vrot.lane.b32.xlu0 %v626, 80
    %v630 = vpop.permute.xlu0 %629
    %v632 = vmul.f32 %v625, %v630
    %634 = vrot.lane.b32.xlu0 %v632, 16
    %v635 = vpop.permute.xlu0 %634
    %v637 = vadd.f32 %v627, %v635
    %v638 = vtanh.pop %v637
    %640 = vrot.lane.b32.xlu0 %v638, 16
    %v641 = vpop.permute.xlu0 %640
    %v643 = vmul.f32 %v625, %v641
    %s644 = scalar_lea.vmem %s2, 28
    %v645 = vld [vmem:[%s644] sm:$0xf]
    %647 = vset.pattern.permute.xlu0 0
    %648 = vperm.xlu0 %647, %v645
    %v649 = vpop.permute.xlu0 %648
    %v651 = vmul.f32 %v649, %v643
    %v652 = vadd.f32 %v578, %v651
    %s653 = scalar_lea.vmem %s0, 32
    %v654 = vld [vmem:[%s653] sm:$0xf]
    %656 = vrot.lane.b32.xlu0 %v643, 96
    %v657 = vpop.permute.xlu0 %656
    %v658 = vsel %vm65, %v657, 0
    %660 = vmatpush.msra.mxu0 0.0
    %661 = vmatpush.msra.mxu0 0.0
    %662 = vmatpush.msra.mxu0 0.0
    %663 = vmatpush.msra.mxu0 0.0
    %664 = vmatpush.msra.mxu0 0.0
    %665 = vmatpush.msra.mxu0 0.0
    %666 = vmatpush.msra.mxu0 0.0
    %667 = vmatpush.msra.mxu0 0.0
    %668 = vmatpush.msra.mxu0 0.0
    %669 = vmatpush.msra.mxu0 0.0
    %670 = vmatpush.msra.mxu0 0.0
    %671 = vmatpush.msra.mxu0 0.0
    %672 = vmatpush.msra.mxu0 0.0
    %673 = vmatpush.msra.mxu0 0.0
    %674 = vmatpush.msra.mxu0 %v63
    %675 = vmatpush.msra.mxu0 %v62
    %676 = vmatmul.f32.gmra.mxu0 %v658
    %v677 = vpop.f32.mrf.mxu0
    %v678 = vadd.f32 0.0, %v677
    %679 = vdwg.mxu0
    %v680 = vadd.f32 %v654, %v678
    %v681 = vxor.u32 %v680, 2147483648
    %v682 = vmul.f32 %v681, 1.442695
    %v683 = vpow.pop %v682
    %v684 = vadd.f32 %v683, 1.0
    %v685 = vrcp.pop %v684
    %v686 = vmul.f32 %v684, %v685
    %v687 = vsub.f32 1.0, %v686
    %v688 = vmul.f32 %v685, %v687
    %v689 = vadd.f32 %v685, %v688
    %vm690 = vweird.f32 %v684
    %vm691 = vweird.f32 %v685
    %vm692 = vmor %vm690, %vm691
    %v693 = vsel %vm692, %v685, %v689
    %v694 = vand.u32 2147483647, %v684
    %vm695 = vcmp.eq.f32.partialorder %v694, 8.507059e+37
    %v696 = vand.u32 %v684, 2147483648
    %v697 = vor.u32 1.1754944e-38, %v696
    %v698 = vsel %vm695, %v697, %v693
    %v699 = vmul.f32 1.0, %v698
    %v700 = vtanh.pop %v680
    %v701 = vmul.f32 %v699, %v637
    %703 = vrot.lane.b32.xlu0 %v700, 80
    %v704 = vpop.permute.xlu0 %703
    %v706 = vmul.f32 %v699, %v704
    %708 = vrot.lane.b32.xlu0 %v706, 16
    %v709 = vpop.permute.xlu0 %708
    %v711 = vadd.f32 %v701, %v709
    %v712 = vtanh.pop %v711
    %714 = vrot.lane.b32.xlu0 %v712, 16
    %v715 = vpop.permute.xlu0 %714
    %v717 = vmul.f32 %v699, %v715
    %s718 = scalar_lea.vmem %s2, 32
    %v719 = vld [vmem:[%s718] sm:$0xf]
    %721 = vset.pattern.permute.xlu0 0
    %722 = vperm.xlu0 %721, %v719
    %v723 = vpop.permute.xlu0 %722
    %v725 = vmul.f32 %v723, %v717
    %v726 = vadd.f32 %v652, %v725
    %v727 = vld [vmem:[%s3] sm:$0xf]
    %v728 = vld [vmem:[#allocation7] sm:$0xff]
    %v729 = vld [vmem:[#allocation7 + $0x8] sm:$0xff]
    %731 = vrot.lane.b32.xlu0 %v726, 96
    %v732 = vpop.permute.xlu0 %731
    %v733 = vsel %vm65, %v732, 0
    %735 = vmatpush.msra.mxu0 0.0
    %736 = vmatpush.msra.mxu0 0.0
    %737 = vmatpush.msra.mxu0 0.0
    %738 = vmatpush.msra.mxu0 0.0
    %739 = vmatpush.msra.mxu0 0.0
    %740 = vmatpush.msra.mxu0 0.0
    %741 = vmatpush.msra.mxu0 0.0
    %742 = vmatpush.msra.mxu0 0.0
    %743 = vmatpush.msra.mxu0 0.0
    %744 = vmatpush.msra.mxu0 0.0
    %745 = vmatpush.msra.mxu0 0.0
    %746 = vmatpush.msra.mxu0 0.0
    %747 = vmatpush.msra.mxu0 0.0
    %748 = vmatpush.msra.mxu0 0.0
    %749 = vmatpush.msra.mxu0 %v729
    %750 = vmatpush.msra.mxu0 %v728
    %751 = vmatmul.f32.gmra.mxu0 %v733
    %v752 = vpop.f32.mrf.mxu0
    %v753 = vadd.f32 0.0, %v752
    %754 = vdwg.mxu0
    %v755 = vadd.f32 %v727, %v753
    %756 = vst [vmem:[#allocation2] sm:$0xf] %v755
    %v757 = vld [vmem:[%s5] sm:$0xff]
    %v758 = vld [vmem:[%s5 + $0x8] sm:$0xff]
    %v759 = vld [vmem:[%s5 + $0x10] sm:$0xff]
    %v760 = vld [vmem:[%s5 + $0x18] sm:$0xff]
    %v761 = vld [vmem:[#allocation2] sm:$0x1]
    %vm762 = vcmask 261120
    %v763 = vsel %vm762, 0.0, 0
    %765 = vmatpush.msra.mxu0 0.0
    %766 = vmatpush.msra.mxu0 0.0
    %767 = vmatpush.msra.mxu0 0.0
    %768 = vmatpush.msra.mxu0 0.0
    %769 = vmatpush.msra.mxu0 0.0
    %770 = vmatpush.msra.mxu0 0.0
    %771 = vmatpush.msra.mxu0 0.0
    %772 = vmatpush.msra.mxu0 0.0
    %773 = vmatpush.msra.mxu0 0.0
    %774 = vmatpush.msra.mxu0 0.0
    %775 = vmatpush.msra.mxu0 0.0
    %776 = vmatpush.msra.mxu0 0.0
    %777 = vmatpush.msra.mxu0 %v760
    %778 = vmatpush.msra.mxu0 %v759
    %779 = vmatpush.msra.mxu0 %v758
    %780 = vmatpush.msra.mxu0 %v757
    %781 = vmatmul.f32.gmra.mxu0 %v763
    %v782 = vpop.f32.mrf.mxu0
    %v783 = vadd.f32 0.0, %v782
    %784 = vdwg.mxu0
    %v785 = vadd.f32 %v761, %v783
    %v786 = vxor.u32 %v785, 2147483648
    %v787 = vmul.f32 %v786, 1.442695
    %v788 = vpow.pop %v787
    %v789 = vadd.f32 %v788, 1.0
    %v790 = vrcp.pop %v789
    %v791 = vmul.f32 %v789, %v790
    %v792 = vsub.f32 1.0, %v791
    %v793 = vmul.f32 %v790, %v792
    %v794 = vadd.f32 %v790, %v793
    %vm795 = vweird.f32 %v789
    %vm796 = vweird.f32 %v790
    %vm797 = vmor %vm795, %vm796
    %v798 = vsel %vm797, %v790, %v794
    %v799 = vand.u32 2147483647, %v789
    %vm800 = vcmp.eq.f32.partialorder %v799, 8.507059e+37
    %v801 = vand.u32 %v789, 2147483648
    %v802 = vor.u32 1.1754944e-38, %v801
    %v803 = vsel %vm800, %v802, %v798
    %v804 = vmul.f32 1.0, %v803
    %v805 = vtanh.pop %v785
    %v806 = vmul.f32 %v804, 0.0
    %808 = vrot.lane.b32.xlu0 %v805, 32
    %v809 = vpop.permute.xlu0 %808
    %v811 = vmul.f32 %v804, %v809
    %813 = vrot.lane.b32.xlu0 %v811, 32
    %v814 = vpop.permute.xlu0 %813
    %v816 = vadd.f32 %v806, %v814
    %v817 = vtanh.pop %v816
    %819 = vrot.lane.b32.xlu0 %v817, 32
    %v820 = vpop.permute.xlu0 %819
    %v822 = vmul.f32 %v804, %v820
    %824 = vrot.lane.b32.xlu0 %v822, 64
    %v825 = vpop.permute.xlu0 %824
    %vm827 = vcmask 253952
    %828 = vst.msk [vmem:[#allocation3] sm:$0x1] %vm827, %v825
    %v829 = vld [vmem:[#allocation2 + $0x1] sm:$0x1]
    %v830 = vsel %vm762, %v825, 0
    %832 = vmatpush.msra.mxu0 0.0
    %833 = vmatpush.msra.mxu0 0.0
    %834 = vmatpush.msra.mxu0 0.0
    %835 = vmatpush.msra.mxu0 0.0
    %836 = vmatpush.msra.mxu0 0.0
    %837 = vmatpush.msra.mxu0 0.0
    %838 = vmatpush.msra.mxu0 0.0
    %839 = vmatpush.msra.mxu0 0.0
    %840 = vmatpush.msra.mxu0 0.0
    %841 = vmatpush.msra.mxu0 0.0
    %842 = vmatpush.msra.mxu0 0.0
    %843 = vmatpush.msra.mxu0 0.0
    %844 = vmatpush.msra.mxu0 %v760
    %845 = vmatpush.msra.mxu0 %v759
    %846 = vmatpush.msra.mxu0 %v758
    %847 = vmatpush.msra.mxu0 %v757
    %848 = vmatmul.f32.gmra.mxu0 %v830
    %v849 = vpop.f32.mrf.mxu0
    %v850 = vadd.f32 0.0, %v849
    %851 = vdwg.mxu0
    %v852 = vadd.f32 %v829, %v850
    %v853 = vxor.u32 %v852, 2147483648
    %v854 = vmul.f32 %v853, 1.442695
    %v855 = vpow.pop %v854
    %v856 = vadd.f32 %v855, 1.0
    %v857 = vrcp.pop %v856
    %v858 = vmul.f32 %v856, %v857
    %v859 = vsub.f32 1.0, %v858
    %v860 = vmul.f32 %v857, %v859
    %v861 = vadd.f32 %v857, %v860
    %vm862 = vweird.f32 %v856
    %vm863 = vweird.f32 %v857
    %vm864 = vmor %vm862, %vm863
    %v865 = vsel %vm864, %v857, %v861
    %v866 = vand.u32 2147483647, %v856
    %vm867 = vcmp.eq.f32.partialorder %v866, 8.507059e+37
    %v868 = vand.u32 %v856, 2147483648
    %v869 = vor.u32 1.1754944e-38, %v868
    %v870 = vsel %vm867, %v869, %v865
    %v871 = vmul.f32 1.0, %v870
    %v872 = vtanh.pop %v852
    %v873 = vmul.f32 %v871, %v816
    %875 = vrot.lane.b32.xlu0 %v872, 32
    %v876 = vpop.permute.xlu0 %875
    %v878 = vmul.f32 %v871, %v876
    %880 = vrot.lane.b32.xlu0 %v878, 32
    %v881 = vpop.permute.xlu0 %880
    %v883 = vadd.f32 %v873, %v881
    %v884 = vtanh.pop %v883
    %886 = vrot.lane.b32.xlu0 %v884, 32
    %v887 = vpop.permute.xlu0 %886
    %v889 = vmul.f32 %v871, %v887
    %891 = vrot.lane.b32.xlu0 %v889, 64
    %v892 = vpop.permute.xlu0 %891
    %894 = vst.msk [vmem:[#allocation3 + $0x1] sm:$0x1] %vm827, %v892
    %v895 = vld [vmem:[#allocation2 + $0x2] sm:$0x1]
    %v896 = vsel %vm762, %v892, 0
    %898 = vmatpush.msra.mxu0 0.0
    %899 = vmatpush.msra.mxu0 0.0
    %900 = vmatpush.msra.mxu0 0.0
    %901 = vmatpush.msra.mxu0 0.0
    %902 = vmatpush.msra.mxu0 0.0
    %903 = vmatpush.msra.mxu0 0.0
    %904 = vmatpush.msra.mxu0 0.0
    %905 = vmatpush.msra.mxu0 0.0
    %906 = vmatpush.msra.mxu0 0.0
    %907 = vmatpush.msra.mxu0 0.0
    %908 = vmatpush.msra.mxu0 0.0
    %909 = vmatpush.msra.mxu0 0.0
    %910 = vmatpush.msra.mxu0 %v760
    %911 = vmatpush.msra.mxu0 %v759
    %912 = vmatpush.msra.mxu0 %v758
    %913 = vmatpush.msra.mxu0 %v757
    %914 = vmatmul.f32.gmra.mxu0 %v896
    %v915 = vpop.f32.mrf.mxu0
    %v916 = vadd.f32 0.0, %v915
    %917 = vdwg.mxu0
    %v918 = vadd.f32 %v895, %v916
    %v919 = vxor.u32 %v918, 2147483648
    %v920 = vmul.f32 %v919, 1.442695
    %v921 = vpow.pop %v920
    %v922 = vadd.f32 %v921, 1.0
    %v923 = vrcp.pop %v922
    %v924 = vmul.f32 %v922, %v923
    %v925 = vsub.f32 1.0, %v924
    %v926 = vmul.f32 %v923, %v925
    %v927 = vadd.f32 %v923, %v926
    %vm928 = vweird.f32 %v922
    %vm929 = vweird.f32 %v923
    %vm930 = vmor %vm928, %vm929
    %v931 = vsel %vm930, %v923, %v927
    %v932 = vand.u32 2147483647, %v922
    %vm933 = vcmp.eq.f32.partialorder %v932, 8.507059e+37
    %v934 = vand.u32 %v922, 2147483648
    %v935 = vor.u32 1.1754944e-38, %v934
    %v936 = vsel %vm933, %v935, %v931
    %v937 = vmul.f32 1.0, %v936
    %v938 = vtanh.pop %v918
    %v939 = vmul.f32 %v937, %v883
    %941 = vrot.lane.b32.xlu0 %v938, 32
    %v942 = vpop.permute.xlu0 %941
    %v944 = vmul.f32 %v937, %v942
    %946 = vrot.lane.b32.xlu0 %v944, 32
    %v947 = vpop.permute.xlu0 %946
    %v949 = vadd.f32 %v939, %v947
    %v950 = vtanh.pop %v949
    %952 = vrot.lane.b32.xlu0 %v950, 32
    %v953 = vpop.permute.xlu0 %952
    %v955 = vmul.f32 %v937, %v953
    %957 = vrot.lane.b32.xlu0 %v955, 64
    %v958 = vpop.permute.xlu0 %957
    %960 = vst.msk [vmem:[#allocation3 + $0x2] sm:$0x1] %vm827, %v958
    %v961 = vld [vmem:[#allocation2 + $0x3] sm:$0x1]
    %v962 = vsel %vm762, %v958, 0
    %964 = vmatpush.msra.mxu0 0.0
    %965 = vmatpush.msra.mxu0 0.0
    %966 = vmatpush.msra.mxu0 0.0
    %967 = vmatpush.msra.mxu0 0.0
    %968 = vmatpush.msra.mxu0 0.0
    %969 = vmatpush.msra.mxu0 0.0
    %970 = vmatpush.msra.mxu0 0.0
    %971 = vmatpush.msra.mxu0 0.0
    %972 = vmatpush.msra.mxu0 0.0
    %973 = vmatpush.msra.mxu0 0.0
    %974 = vmatpush.msra.mxu0 0.0
    %975 = vmatpush.msra.mxu0 0.0
    %976 = vmatpush.msra.mxu0 %v760
    %977 = vmatpush.msra.mxu0 %v759
    %978 = vmatpush.msra.mxu0 %v758
    %979 = vmatpush.msra.mxu0 %v757
    %980 = vmatmul.f32.gmra.mxu0 %v962
    %v981 = vpop.f32.mrf.mxu0
    %v982 = vadd.f32 0.0, %v981
    %983 = vdwg.mxu0
    %v984 = vadd.f32 %v961, %v982
    %v985 = vxor.u32 %v984, 2147483648
    %v986 = vmul.f32 %v985, 1.442695
    %v987 = vpow.pop %v986
    %v988 = vadd.f32 %v987, 1.0
    %v989 = vrcp.pop %v988
    %v990 = vmul.f32 %v988, %v989
    %v991 = vsub.f32 1.0, %v990
    %v992 = vmul.f32 %v989, %v991
    %v993 = vadd.f32 %v989, %v992
    %vm994 = vweird.f32 %v988
    %vm995 = vweird.f32 %v989
    %vm996 = vmor %vm994, %vm995
    %v997 = vsel %vm996, %v989, %v993
    %v998 = vand.u32 2147483647, %v988
    %vm999 = vcmp.eq.f32.partialorder %v998, 8.507059e+37
    %v1000 = vand.u32 %v988, 2147483648
    %v1001 = vor.u32 1.1754944e-38, %v1000
    %v1002 = vsel %vm999, %v1001, %v997
    %v1003 = vmul.f32 1.0, %v1002
    %v1004 = vtanh.pop %v984
    %v1005 = vmul.f32 %v1003, %v949
    %1007 = vrot.lane.b32.xlu0 %v1004, 32
    %v1008 = vpop.permute.xlu0 %1007
    %v1010 = vmul.f32 %v1003, %v1008
    %1012 = vrot.lane.b32.xlu0 %v1010, 32
    %v1013 = vpop.permute.xlu0 %1012
    %v1015 = vadd.f32 %v1005, %v1013
    %v1016 = vtanh.pop %v1015
    %1018 = vrot.lane.b32.xlu0 %v1016, 32
    %v1019 = vpop.permute.xlu0 %1018
    %v1021 = vmul.f32 %v1003, %v1019
    %1023 = vrot.lane.b32.xlu0 %v1021, 64
    %v1024 = vpop.permute.xlu0 %1023
    %1026 = vst.msk [vmem:[#allocation3 + $0x3] sm:$0x1] %vm827, %v1024
    %v1027 = vld [vmem:[#allocation3] sm:$0xf]
    %v1028 = vld [vmem:[%s6] sm:$0xff]
    %v1029 = vld [vmem:[%s6 + $0x8] sm:$0xff]
    %v1030 = vld [vmem:[%s6 + $0x10] sm:$0xff]
    %v1031 = vld [vmem:[%s6 + $0x18] sm:$0xff]
    %v1032 = vld [vmem:[%s7] sm:$0x1]
    %v1034 = vperm.slane %v1032, 0
    %v1037 = vsel %vm762, %v1027, 0
    %1039 = vmatpush.msra.mxu0 0.0
    %1040 = vmatpush.msra.mxu0 0.0
    %1041 = vmatpush.msra.mxu0 0.0
    %1042 = vmatpush.msra.mxu0 0.0
    %1043 = vmatpush.msra.mxu0 0.0
    %1044 = vmatpush.msra.mxu0 0.0
    %1045 = vmatpush.msra.mxu0 0.0
    %1046 = vmatpush.msra.mxu0 0.0
    %1047 = vmatpush.msra.mxu0 0.0
    %1048 = vmatpush.msra.mxu0 0.0
    %1049 = vmatpush.msra.mxu0 0.0
    %1050 = vmatpush.msra.mxu0 0.0
    %1051 = vmatpush.msra.mxu0 %v1031
    %1052 = vmatpush.msra.mxu0 %v1030
    %1053 = vmatpush.msra.mxu0 %v1029
    %1054 = vmatpush.msra.mxu0 %v1028
    %1055 = vmatmul.f32.gmra.mxu0 %v1037
    %v1056 = vpop.f32.mrf.mxu0
    %v1057 = vadd.f32 %v1034, %v1056
    %1058 = vdwg.mxu0
    %vm1059 = vcmask 19456
    %1060 = vst.msk [vmem:[#allocation9] sm:$0xf] %vm1059, %v1057
    // Predicated region
    $region42: #{tpu_custom_call.1} parent=1 // pred_check
      _
    $region43: #{tpu_custom_call.1} parent=1 // pred_check_branch
      %1062 = sbr.rel (0) target = $region45
    $region44: #{tpu_custom_call.1} parent=1 // pred_region
      %1064 = vsyncadd [#allocation6], 0
      %s1066 = sshll.u32 [#allocation9], 4
      %s1067 = int_to_ptr.vmem [resolvable:$true] %s1066
      %s1068 = sshll.u32 %s8, 4
      %s1069 = int_to_ptr.hbm [resolvable:$true] %s1068
      %1071 = dma.vmem_to_hbm [thread:$0]  %s1067, 64, %s1069, [#allocation6]
    $region45: #{tpu_custom_call.1} parent=1 // pred_fallthru
      _
    // Predicated region
    $region46: #{tpu_custom_call.1} parent=1 // pred_check
      _
    $region47: #{tpu_custom_call.1} parent=1 // pred_check_branch
      %1073 = sbr.rel (0) target = $region49
    $region48: #{tpu_custom_call.1} parent=1 // pred_region
      %1075 = dma.done [#allocation6], 64
    $region49: #{tpu_custom_call.1} parent=1 // pred_fallthru
      _
    %1076 = vsyncpa [#allocation5], 1
    %1077 = vsyncpa [#allocation8], 1
    %1078 = vsyncpa [#allocation6], 1

</llo_original>
